<compile_context>
chip_gen: v6e
topology: v6e:2x2x1
jax: 0.10.0
libtpu: 0.0.40
codegen_flags: <defaults>
</compile_context>

<pallas_src>
import math
from functools import partial

import jax
import jax.numpy as jnp
from jax.experimental import pallas as pl
from jax.experimental.pallas import tpu as pltpu


# ----------------------------------------------------------------------------
# Kernel: entire CrossAttentionN forward in one invocation.
# ----------------------------------------------------------------------------
def _cross_attn_n_kernel(x_ref, ctx_ref, w_ref, b_ref, out_ref, *,
                         num_joints, num_heads):
    B, M, D = x_ref.shape              # M = T * N  (joints on the sublane axis)
    _, C, _ = ctx_ref.shape
    N = num_joints
    H = num_heads
    dp = D // H
    ND = N * D

    x = x_ref[...]                     # (B, M, D)
    ctx = ctx_ref[...]                 # (B, C, D)

    # ---- Q projection for ALL joints: one lane-dense matmul against the packed,
    #      pre-scaled per-joint weights, then a per-row joint-block select.
    wq_cat = w_ref[0, :, 0:ND]                               # (D, N*D)
    bq_cat = b_ref[0:1, 0:ND]                                # (1, N*D)
    q_cand = jnp.einsum("bmd,de->bme", x, wq_cat,
                        preferred_element_type=jnp.float32) + bq_cat  # (B, M, N*D)

    rows = jax.lax.broadcasted_iota(jnp.int32, (M, D), 0)    # row index m
    joint_of_row = rows % N                                  # row m -> joint m % N
    q = None
    for n in range(N):                                       # static unroll (N small)
        sel = (joint_of_row == n).astype(q_cand.dtype)       # (M, D) 0/1 mask
        term = q_cand[:, :, n * D:(n + 1) * D] * sel
        q = term if q is None else q + term                  # (B, M, D) f32

    # ---- Shared K / V: joint-invariant, computed ONCE with a single matmul.
    wkv = w_ref[1, :, 0:2 * D]                               # (D, 2D)  [K | V]
    bkv = b_ref[1:2, 0:2 * D]                                # (1, 2D)
    kv = jnp.einsum("bcd,de->bce", ctx, wkv,
                    preferred_element_type=jnp.float32) + bkv          # (B, C, 2D)

    # ---- Attention, batched over all joints (rows); static unroll over heads.
    head_outs = []
    for h in range(H):
        qh = q[:, :, h * dp:(h + 1) * dp]                    # (B, M, dp)
        kh = kv[:, :, h * dp:(h + 1) * dp]                   # (B, C, dp)
        vh = kv[:, :, D + h * dp:D + (h + 1) * dp]           # (B, C, dp)
        logits = jnp.einsum("bme,bce->bmc", qh, kh,
                            preferred_element_type=jnp.float32)        # (B, M, C)
        mmax = jnp.max(logits, axis=-1, keepdims=True)
        e = jnp.exp(logits - mmax)
        s = jnp.sum(e, axis=-1, keepdims=True)
        p = e * pl.reciprocal(s, approx=True)                # EUP reciprocal
        head_outs.append(jnp.einsum("bmc,bce->bme", p, vh,
                                    preferred_element_type=jnp.float32))

    merged = jnp.concatenate(head_outs, axis=-1)             # (B, M, D) merge_head

    # ---- Output projection: joints are rows, so the shared wo applies directly
    #      with ONE matmul (no per-joint loop, no block-diagonal, no big concat).
    wo = w_ref[2, :, 0:D]                                    # (D, D)
    bo = b_ref[2:3, 0:D]                                     # (1, D)
    out_ref[...] = jnp.einsum("bmd,de->bme", merged.astype(wo.dtype), wo,
                              preferred_element_type=jnp.float32) + bo


# ----------------------------------------------------------------------------
# Wrapper-side parameter packing (done once, outside the kernel).
# ----------------------------------------------------------------------------
def _pack_params(params, num_joints, d_model, num_heads, dtype):
    D = d_model
    N = num_joints
    dp = D // num_heads
    ND = N * D
    slab = max(ND, 2 * D)
    scale = 1.0 / math.sqrt(dp)

    # Horizontally packed per-joint Q weights, 1/sqrt(dp) pre-folded.
    wq_cat = jnp.transpose(params["wq"] * scale, (1, 0, 2)).reshape(D, ND)
    bq_cat = (params["bq"] * scale).reshape(1, ND)
    # K and V fused into a single (D, 2D) projection.
    w_kv = jnp.concatenate([params["wk"], params["wv"]], axis=1)       # (D, 2D)
    b_kv = jnp.concatenate([params["bk"], params["bv"]], axis=1)       # (1, 2D)

    W = jnp.zeros((3, D, slab), jnp.float32)
    W = W.at[0, :, :ND].set(wq_cat)
    W = W.at[1, :, :2 * D].set(w_kv)
    W = W.at[2, :, :D].set(params["wo"])

    bvec = jnp.zeros((3, slab), jnp.float32)
    bvec = bvec.at[0, :ND].set(bq_cat[0])
    bvec = bvec.at[1, :2 * D].set(b_kv[0])
    bvec = bvec.at[2, :D].set(params["bo"][0])

    # Biases stay f32 (they are added to f32 accumulators).
    return W.astype(dtype), bvec


def cross_attention_n(params, x, context=None, *, num_heads,
                      compute_dtype=jnp.float32):
    """Matches CrossAttentionN.forward: x (B,T,N,D), context (B,C,D) -> (B,T,N,D)."""
    if context is None:
        return x
    B, T, N, D = x.shape
    W, bvec = _pack_params(params, N, D, num_heads, compute_dtype)
    x_flat = x.reshape(B, T * N, D).astype(compute_dtype)    # free reshape: row = t*N + n
    ctx = context.astype(compute_dtype)

    vmem = pl.BlockSpec(memory_space=pltpu.MemorySpace.VMEM)
    out = pl.pallas_call(
        partial(_cross_attn_n_kernel, num_joints=N, num_heads=num_heads),
        out_shape=jax.ShapeDtypeStruct((B, T * N, D), jnp.float32),
        in_specs=[vmem, vmem, vmem, vmem],
        out_specs=vmem,
    )(x_flat, ctx, W, bvec)
    return out.reshape(B, T, N, D)


# ----------------------------------------------------------------------------
if __name__ == "__main__":
    B, T, N, D = 2, 8, 4, 32          # batch, seq, joints, d_model
    H = 4                             # heads
    C = 6                             # context length

    root = jax.random.PRNGKey(0)
    keys = jax.random.split(root, 10)

    def nrm(k, shape, scale=0.05):
        return jax.random.normal(k, shape, jnp.float32) * scale

    params = {
        "wq": nrm(keys[0], (N, D, D)),      # per-joint query projections
        "bq": nrm(keys[1], (N, 1, D)),
        "wk": nrm(keys[2], (D, D)),         # shared K / V / out projections
        "bk": nrm(keys[3], (1, D)),
        "wv": nrm(keys[4], (D, D)),
        "bv": nrm(keys[5], (1, D)),
        "wo": nrm(keys[6], (D, D)),
        "bo": nrm(keys[7], (1, D)),
    }
    x = jax.random.normal(keys[8], (B, T, N, D), jnp.float32)
    context = jax.random.normal(keys[9], (B, C, D), jnp.float32)

    fwd = jax.jit(partial(cross_attention_n, num_heads=H))
    out = fwd(params, x, context)
    jax.block_until_ready(out)

    # Pure-JAX reference (same math as the PyTorch module) for a sanity check.
    hp = jax.lax.Precision.HIGHEST

    def reference(params, x, context):
        dp = D // H
        xn = jnp.transpose(x, (2, 0, 1, 3))                      # (N, B, T, D)
        k = jnp.einsum("bcd,de->bce", context, params["wk"], precision=hp) + params["bk"]
        v = jnp.einsum("bcd,de->bce", context, params["wv"], precision=hp) + params["bv"]
        kh = k.reshape(B, C, H, dp).transpose(0, 2, 1, 3)        # split_head
        vh = v.reshape(B, C, H, dp).transpose(0, 2, 1, 3)
        outs = []
        for j in range(N):
            q = jnp.einsum("btd,de->bte", xn[j], params["wq"][j],
                           precision=hp) + params["bq"][j]
            qh = q.reshape(B, T, H, dp).transpose(0, 2, 1, 3)
            w = jnp.einsum("bhtd,bhcd->bhtc", qh, kh, precision=hp) / math.sqrt(dp)
            p = jax.nn.softmax(w, axis=-1)
            a = jnp.einsum("bhtc,bhcd->bhtd", p, vh, precision=hp)
            a = a.transpose(0, 2, 1, 3).reshape(B, T, D)         # merge_head
            outs.append(jnp.einsum("btd,de->bte", a, params["wo"],
                                   precision=hp) + params["bo"])
        return jnp.stack(outs, axis=2)                           # (B, T, N, D)

    expected = reference(params, x, context)

    assert out.shape == (B, T, N, D)
    assert bool(jnp.all(jnp.isfinite(out)))
    assert bool(jnp.allclose(out, expected, atol=2e-3, rtol=2e-2))
    assert cross_attention_n(params, x, None, num_heads=H) is x   # context=None path
    print("KERNEL_OK")
</pallas_src>

<mosaic_0001>
module attributes {stable_mosaic.version = 11 : i64} {
  func.func @_cross_attn_n_kernel(%arg0: memref<2x32x32xf32, #tpu.memory_space<vmem>>, %arg1: memref<2x6x32xf32, #tpu.memory_space<vmem>>, %arg2: memref<3x32x128xf32, #tpu.memory_space<vmem>>, %arg3: memref<3x128xf32, #tpu.memory_space<vmem>>, %arg4: memref<2x32x32xf32, #tpu.memory_space<vmem>>) attributes {dimension_semantics = [], scalar_prefetch = 0 : i64, scratch_operands = 0 : i64, tpu.core_type = #tpu.core_type<tc>} {
    %c0 = arith.constant 0 : index
    %c0_0 = arith.constant 0 : index
    %c0_1 = arith.constant 0 : index
    %0 = vector.load %arg0[%c0, %c0_0, %c0_1] : memref<2x32x32xf32, #tpu.memory_space<vmem>>, vector<2x32x32xf32>
    %c0_2 = arith.constant 0 : index
    %c0_3 = arith.constant 0 : index
    %c0_4 = arith.constant 0 : index
    %1 = vector.load %arg1[%c0_2, %c0_3, %c0_4] : memref<2x6x32xf32, #tpu.memory_space<vmem>>, vector<2x6x32xf32>
    %c0_5 = arith.constant 0 : index
    %c0_6 = arith.constant 0 : index
    %c0_7 = arith.constant 0 : index
    %2 = vector.load %arg2[%c0_5, %c0_6, %c0_7] : memref<3x32x128xf32, #tpu.memory_space<vmem>>, vector<1x32x128xf32>
    %3 = vector.shape_cast %2 : vector<1x32x128xf32> to vector<32x128xf32>
    %c0_8 = arith.constant 0 : index
    %c0_9 = arith.constant 0 : index
    %4 = vector.load %arg3[%c0_8, %c0_9] : memref<3x128xf32, #tpu.memory_space<vmem>>, vector<1x128xf32>
    "tpu.trace_start"() <{level = 10 : i32, message = "bmd,de->bme"}> : () -> ()
    %cst = arith.constant dense<0.000000e+00> : vector<2x32x128xf32>
    %5 = tpu.matmul %0, %3, %cst {dimension_numbers = #tpu.dot_dimension_numbers<[2], [0], [0, 1], [1], [0, 0, 0, 1, 1, 1], [], []>} : vector<2x32x32xf32>, vector<32x128xf32>, vector<2x32x128xf32> -> vector<2x32x128xf32>
    "tpu.trace_stop"() : () -> ()
    %6 = vector.shape_cast %4 : vector<1x128xf32> to vector<1x1x128xf32>
    %7 = vector.broadcast %6 : vector<1x1x128xf32> to vector<2x32x128xf32>
    %8 = arith.addf %5, %7 : vector<2x32x128xf32>
    %9 = tpu.iota {dimensions = array<i32: 0>} : vector<32x32xi32>
    %c4_i32 = arith.constant 4 : i32
    %c0_i32 = arith.constant 0 : i32
    %10 = arith.cmpi eq, %c4_i32, %c0_i32 : i32
    %c1_i32 = arith.constant 1 : i32
    %11 = arith.select %10, %c1_i32, %c4_i32 : i32
    %12 = vector.broadcast %11 : i32 to vector<32x32xi32>
    %13 = arith.remsi %9, %12 : vector<32x32xi32>
    %c0_i32_10 = arith.constant 0 : i32
    %14 = vector.broadcast %c0_i32_10 : i32 to vector<32x32xi32>
    %15 = arith.cmpi ne, %13, %14 : vector<32x32xi32>
    %c0_i32_11 = arith.constant 0 : i32
    %16 = vector.broadcast %c0_i32_11 : i32 to vector<32x32xi32>
    %17 = arith.cmpi slt, %13, %16 : vector<32x32xi32>
    %c0_i32_12 = arith.constant 0 : i32
    %18 = arith.cmpi slt, %11, %c0_i32_12 : i32
    %19 = vector.broadcast %18 : i1 to vector<32x32xi1>
    %20 = vector.broadcast %19 : vector<32x32xi1> to vector<32x32xi1>
    %21 = arith.xori %17, %20 : vector<32x32xi1>
    %22 = arith.andi %21, %15 : vector<32x32xi1>
    %23 = vector.broadcast %11 : i32 to vector<32x32xi32>
    %24 = arith.addi %13, %23 : vector<32x32xi32>
    %25 = arith.select %22, %24, %13 : vector<32x32xi1>, vector<32x32xi32>
    %c0_i32_13 = arith.constant 0 : i32
    %26 = vector.broadcast %c0_i32_13 : i32 to vector<32x32xi32>
    %27 = arith.cmpi eq, %25, %26 : vector<32x32xi32>
    %28 = arith.extui %27 : vector<32x32xi1> to vector<32x32xi32>
    %29 = arith.sitofp %28 : vector<32x32xi32> to vector<32x32xf32>
    %30 = vector.extract_strided_slice %8 {offsets = [0, 0, 0], sizes = [2, 32, 32], strides = [1, 1, 1]} : vector<2x32x128xf32> to vector<2x32x32xf32>
    %31 = vector.shape_cast %29 : vector<32x32xf32> to vector<1x32x32xf32>
    %32 = vector.broadcast %31 : vector<1x32x32xf32> to vector<2x32x32xf32>
    %33 = arith.mulf %30, %32 : vector<2x32x32xf32>
    %c1_i32_14 = arith.constant 1 : i32
    %34 = vector.broadcast %c1_i32_14 : i32 to vector<32x32xi32>
    %35 = arith.cmpi eq, %25, %34 : vector<32x32xi32>
    %36 = arith.extui %35 : vector<32x32xi1> to vector<32x32xi32>
    %37 = arith.sitofp %36 : vector<32x32xi32> to vector<32x32xf32>
    %38 = vector.extract_strided_slice %8 {offsets = [0, 0, 32], sizes = [2, 32, 32], strides = [1, 1, 1]} : vector<2x32x128xf32> to vector<2x32x32xf32>
    %39 = vector.shape_cast %37 : vector<32x32xf32> to vector<1x32x32xf32>
    %40 = vector.broadcast %39 : vector<1x32x32xf32> to vector<2x32x32xf32>
    %41 = arith.mulf %38, %40 : vector<2x32x32xf32>
    %42 = arith.addf %33, %41 : vector<2x32x32xf32>
    %c2_i32 = arith.constant 2 : i32
    %43 = vector.broadcast %c2_i32 : i32 to vector<32x32xi32>
    %44 = arith.cmpi eq, %25, %43 : vector<32x32xi32>
    %45 = arith.extui %44 : vector<32x32xi1> to vector<32x32xi32>
    %46 = arith.sitofp %45 : vector<32x32xi32> to vector<32x32xf32>
    %47 = vector.extract_strided_slice %8 {offsets = [0, 0, 64], sizes = [2, 32, 32], strides = [1, 1, 1]} : vector<2x32x128xf32> to vector<2x32x32xf32>
    %48 = vector.shape_cast %46 : vector<32x32xf32> to vector<1x32x32xf32>
    %49 = vector.broadcast %48 : vector<1x32x32xf32> to vector<2x32x32xf32>
    %50 = arith.mulf %47, %49 : vector<2x32x32xf32>
    %51 = arith.addf %42, %50 : vector<2x32x32xf32>
    %c3_i32 = arith.constant 3 : i32
    %52 = vector.broadcast %c3_i32 : i32 to vector<32x32xi32>
    %53 = arith.cmpi eq, %25, %52 : vector<32x32xi32>
    %54 = arith.extui %53 : vector<32x32xi1> to vector<32x32xi32>
    %55 = arith.sitofp %54 : vector<32x32xi32> to vector<32x32xf32>
    %56 = vector.extract_strided_slice %8 {offsets = [0, 0, 96], sizes = [2, 32, 32], strides = [1, 1, 1]} : vector<2x32x128xf32> to vector<2x32x32xf32>
    %57 = vector.shape_cast %55 : vector<32x32xf32> to vector<1x32x32xf32>
    %58 = vector.broadcast %57 : vector<1x32x32xf32> to vector<2x32x32xf32>
    %59 = arith.mulf %56, %58 : vector<2x32x32xf32>
    %60 = arith.addf %51, %59 : vector<2x32x32xf32>
    %c1 = arith.constant 1 : index
    %c0_15 = arith.constant 0 : index
    %c0_16 = arith.constant 0 : index
    %61 = vector.load %arg2[%c1, %c0_15, %c0_16] : memref<3x32x128xf32, #tpu.memory_space<vmem>>, vector<1x32x64xf32>
    %62 = vector.shape_cast %61 : vector<1x32x64xf32> to vector<32x64xf32>
    %c1_17 = arith.constant 1 : index
    %c0_18 = arith.constant 0 : index
    %63 = vector.load %arg3[%c1_17, %c0_18] : memref<3x128xf32, #tpu.memory_space<vmem>>, vector<1x64xf32>
    "tpu.trace_start"() <{level = 10 : i32, message = "bcd,de->bce"}> : () -> ()
    %cst_19 = arith.constant dense<0.000000e+00> : vector<2x6x64xf32>
    %64 = tpu.matmul %1, %62, %cst_19 {dimension_numbers = #tpu.dot_dimension_numbers<[2], [0], [0, 1], [1], [0, 0, 0, 1, 1, 1], [], []>} : vector<2x6x32xf32>, vector<32x64xf32>, vector<2x6x64xf32> -> vector<2x6x64xf32>
    "tpu.trace_stop"() : () -> ()
    %65 = vector.shape_cast %63 : vector<1x64xf32> to vector<1x1x64xf32>
    %66 = vector.broadcast %65 : vector<1x1x64xf32> to vector<2x6x64xf32>
    %67 = arith.addf %64, %66 : vector<2x6x64xf32>
    %68 = vector.extract_strided_slice %60 {offsets = [0, 0, 0], sizes = [2, 32, 8], strides = [1, 1, 1]} : vector<2x32x32xf32> to vector<2x32x8xf32>
    %69 = vector.extract_strided_slice %67 {offsets = [0, 0, 0], sizes = [2, 6, 8], strides = [1, 1, 1]} : vector<2x6x64xf32> to vector<2x6x8xf32>
    %70 = vector.extract_strided_slice %67 {offsets = [0, 0, 32], sizes = [2, 6, 8], strides = [1, 1, 1]} : vector<2x6x64xf32> to vector<2x6x8xf32>
    "tpu.trace_start"() <{level = 10 : i32, message = "bme,bce->bmc"}> : () -> ()
    %cst_20 = arith.constant dense<0.000000e+00> : vector<2x32x6xf32>
    %71 = tpu.matmul %68, %69, %cst_20 {dimension_numbers = #tpu.dot_dimension_numbers<[2], [2], [1], [1], [0, 0, 0, 1, 1, 1], [0], [0]>} : vector<2x32x8xf32>, vector<2x6x8xf32>, vector<2x32x6xf32> -> vector<2x32x6xf32>
    "tpu.trace_stop"() : () -> ()
    %cst_21 = arith.constant dense<0xFF800000> : vector<2x32xf32>
    %72 = vector.multi_reduction <maximumf>, %71, %cst_21 [2] : vector<2x32x6xf32> to vector<2x32xf32>
    %73 = vector.shape_cast %72 : vector<2x32xf32> to vector<2x32x1xf32>
    %74 = vector.broadcast %73 : vector<2x32x1xf32> to vector<2x32x6xf32>
    %75 = arith.subf %71, %74 : vector<2x32x6xf32>
    %76 = math.exp %75 : vector<2x32x6xf32>
    %cst_22 = arith.constant dense<0.000000e+00> : vector<2x32xf32>
    %77 = vector.multi_reduction <add>, %76, %cst_22 [2] : vector<2x32x6xf32> to vector<2x32xf32>
    %78 = vector.shape_cast %77 : vector<2x32xf32> to vector<2x32x1xf32>
    %79 = tpu.reciprocal %78 {approx = true} : vector<2x32x1xf32> -> vector<2x32x1xf32>
    %80 = vector.broadcast %79 : vector<2x32x1xf32> to vector<2x32x6xf32>
    %81 = arith.mulf %76, %80 : vector<2x32x6xf32>
    "tpu.trace_start"() <{level = 10 : i32, message = "bmc,bce->bme"}> : () -> ()
    %cst_23 = arith.constant dense<0.000000e+00> : vector<2x32x8xf32>
    %82 = tpu.matmul %81, %70, %cst_23 {dimension_numbers = #tpu.dot_dimension_numbers<[2], [1], [1], [2], [0, 0, 0, 1, 1, 2], [0], [0]>} : vector<2x32x6xf32>, vector<2x6x8xf32>, vector<2x32x8xf32> -> vector<2x32x8xf32>
    "tpu.trace_stop"() : () -> ()
    %83 = vector.extract_strided_slice %60 {offsets = [0, 0, 8], sizes = [2, 32, 8], strides = [1, 1, 1]} : vector<2x32x32xf32> to vector<2x32x8xf32>
    %84 = vector.extract_strided_slice %67 {offsets = [0, 0, 8], sizes = [2, 6, 8], strides = [1, 1, 1]} : vector<2x6x64xf32> to vector<2x6x8xf32>
    %85 = vector.extract_strided_slice %67 {offsets = [0, 0, 40], sizes = [2, 6, 8], strides = [1, 1, 1]} : vector<2x6x64xf32> to vector<2x6x8xf32>
    "tpu.trace_start"() <{level = 10 : i32, message = "bme,bce->bmc"}> : () -> ()
    %cst_24 = arith.constant dense<0.000000e+00> : vector<2x32x6xf32>
    %86 = tpu.matmul %83, %84, %cst_24 {dimension_numbers = #tpu.dot_dimension_numbers<[2], [2], [1], [1], [0, 0, 0, 1, 1, 1], [0], [0]>} : vector<2x32x8xf32>, vector<2x6x8xf32>, vector<2x32x6xf32> -> vector<2x32x6xf32>
    "tpu.trace_stop"() : () -> ()
    %cst_25 = arith.constant dense<0xFF800000> : vector<2x32xf32>
    %87 = vector.multi_reduction <maximumf>, %86, %cst_25 [2] : vector<2x32x6xf32> to vector<2x32xf32>
    %88 = vector.shape_cast %87 : vector<2x32xf32> to vector<2x32x1xf32>
    %89 = vector.broadcast %88 : vector<2x32x1xf32> to vector<2x32x6xf32>
    %90 = arith.subf %86, %89 : vector<2x32x6xf32>
    %91 = math.exp %90 : vector<2x32x6xf32>
    %cst_26 = arith.constant dense<0.000000e+00> : vector<2x32xf32>
    %92 = vector.multi_reduction <add>, %91, %cst_26 [2] : vector<2x32x6xf32> to vector<2x32xf32>
    %93 = vector.shape_cast %92 : vector<2x32xf32> to vector<2x32x1xf32>
    %94 = tpu.reciprocal %93 {approx = true} : vector<2x32x1xf32> -> vector<2x32x1xf32>
    %95 = vector.broadcast %94 : vector<2x32x1xf32> to vector<2x32x6xf32>
    %96 = arith.mulf %91, %95 : vector<2x32x6xf32>
    "tpu.trace_start"() <{level = 10 : i32, message = "bmc,bce->bme"}> : () -> ()
    %cst_27 = arith.constant dense<0.000000e+00> : vector<2x32x8xf32>
    %97 = tpu.matmul %96, %85, %cst_27 {dimension_numbers = #tpu.dot_dimension_numbers<[2], [1], [1], [2], [0, 0, 0, 1, 1, 2], [0], [0]>} : vector<2x32x6xf32>, vector<2x6x8xf32>, vector<2x32x8xf32> -> vector<2x32x8xf32>
    "tpu.trace_stop"() : () -> ()
    %98 = vector.extract_strided_slice %60 {offsets = [0, 0, 16], sizes = [2, 32, 8], strides = [1, 1, 1]} : vector<2x32x32xf32> to vector<2x32x8xf32>
    %99 = vector.extract_strided_slice %67 {offsets = [0, 0, 16], sizes = [2, 6, 8], strides = [1, 1, 1]} : vector<2x6x64xf32> to vector<2x6x8xf32>
    %100 = vector.extract_strided_slice %67 {offsets = [0, 0, 48], sizes = [2, 6, 8], strides = [1, 1, 1]} : vector<2x6x64xf32> to vector<2x6x8xf32>
    "tpu.trace_start"() <{level = 10 : i32, message = "bme,bce->bmc"}> : () -> ()
    %cst_28 = arith.constant dense<0.000000e+00> : vector<2x32x6xf32>
    %101 = tpu.matmul %98, %99, %cst_28 {dimension_numbers = #tpu.dot_dimension_numbers<[2], [2], [1], [1], [0, 0, 0, 1, 1, 1], [0], [0]>} : vector<2x32x8xf32>, vector<2x6x8xf32>, vector<2x32x6xf32> -> vector<2x32x6xf32>
    "tpu.trace_stop"() : () -> ()
    %cst_29 = arith.constant dense<0xFF800000> : vector<2x32xf32>
    %102 = vector.multi_reduction <maximumf>, %101, %cst_29 [2] : vector<2x32x6xf32> to vector<2x32xf32>
    %103 = vector.shape_cast %102 : vector<2x32xf32> to vector<2x32x1xf32>
    %104 = vector.broadcast %103 : vector<2x32x1xf32> to vector<2x32x6xf32>
    %105 = arith.subf %101, %104 : vector<2x32x6xf32>
    %106 = math.exp %105 : vector<2x32x6xf32>
    %cst_30 = arith.constant dense<0.000000e+00> : vector<2x32xf32>
    %107 = vector.multi_reduction <add>, %106, %cst_30 [2] : vector<2x32x6xf32> to vector<2x32xf32>
    %108 = vector.shape_cast %107 : vector<2x32xf32> to vector<2x32x1xf32>
    %109 = tpu.reciprocal %108 {approx = true} : vector<2x32x1xf32> -> vector<2x32x1xf32>
    %110 = vector.broadcast %109 : vector<2x32x1xf32> to vector<2x32x6xf32>
    %111 = arith.mulf %106, %110 : vector<2x32x6xf32>
    "tpu.trace_start"() <{level = 10 : i32, message = "bmc,bce->bme"}> : () -> ()
    %cst_31 = arith.constant dense<0.000000e+00> : vector<2x32x8xf32>
    %112 = tpu.matmul %111, %100, %cst_31 {dimension_numbers = #tpu.dot_dimension_numbers<[2], [1], [1], [2], [0, 0, 0, 1, 1, 2], [0], [0]>} : vector<2x32x6xf32>, vector<2x6x8xf32>, vector<2x32x8xf32> -> vector<2x32x8xf32>
    "tpu.trace_stop"() : () -> ()
    %113 = vector.extract_strided_slice %60 {offsets = [0, 0, 24], sizes = [2, 32, 8], strides = [1, 1, 1]} : vector<2x32x32xf32> to vector<2x32x8xf32>
    %114 = vector.extract_strided_slice %67 {offsets = [0, 0, 24], sizes = [2, 6, 8], strides = [1, 1, 1]} : vector<2x6x64xf32> to vector<2x6x8xf32>
    %115 = vector.extract_strided_slice %67 {offsets = [0, 0, 56], sizes = [2, 6, 8], strides = [1, 1, 1]} : vector<2x6x64xf32> to vector<2x6x8xf32>
    "tpu.trace_start"() <{level = 10 : i32, message = "bme,bce->bmc"}> : () -> ()
    %cst_32 = arith.constant dense<0.000000e+00> : vector<2x32x6xf32>
    %116 = tpu.matmul %113, %114, %cst_32 {dimension_numbers = #tpu.dot_dimension_numbers<[2], [2], [1], [1], [0, 0, 0, 1, 1, 1], [0], [0]>} : vector<2x32x8xf32>, vector<2x6x8xf32>, vector<2x32x6xf32> -> vector<2x32x6xf32>
    "tpu.trace_stop"() : () -> ()
    %cst_33 = arith.constant dense<0xFF800000> : vector<2x32xf32>
    %117 = vector.multi_reduction <maximumf>, %116, %cst_33 [2] : vector<2x32x6xf32> to vector<2x32xf32>
    %118 = vector.shape_cast %117 : vector<2x32xf32> to vector<2x32x1xf32>
    %119 = vector.broadcast %118 : vector<2x32x1xf32> to vector<2x32x6xf32>
    %120 = arith.subf %116, %119 : vector<2x32x6xf32>
    %121 = math.exp %120 : vector<2x32x6xf32>
    %cst_34 = arith.constant dense<0.000000e+00> : vector<2x32xf32>
    %122 = vector.multi_reduction <add>, %121, %cst_34 [2] : vector<2x32x6xf32> to vector<2x32xf32>
    %123 = vector.shape_cast %122 : vector<2x32xf32> to vector<2x32x1xf32>
    %124 = tpu.reciprocal %123 {approx = true} : vector<2x32x1xf32> -> vector<2x32x1xf32>
    %125 = vector.broadcast %124 : vector<2x32x1xf32> to vector<2x32x6xf32>
    %126 = arith.mulf %121, %125 : vector<2x32x6xf32>
    "tpu.trace_start"() <{level = 10 : i32, message = "bmc,bce->bme"}> : () -> ()
    %cst_35 = arith.constant dense<0.000000e+00> : vector<2x32x8xf32>
    %127 = tpu.matmul %126, %115, %cst_35 {dimension_numbers = #tpu.dot_dimension_numbers<[2], [1], [1], [2], [0, 0, 0, 1, 1, 2], [0], [0]>} : vector<2x32x6xf32>, vector<2x6x8xf32>, vector<2x32x8xf32> -> vector<2x32x8xf32>
    "tpu.trace_stop"() : () -> ()
    %128 = tpu.concatenate %82, %97, %112, %127 in 2 : vector<2x32x8xf32>, vector<2x32x8xf32>, vector<2x32x8xf32>, vector<2x32x8xf32> -> vector<2x32x32xf32>
    %c2 = arith.constant 2 : index
    %c0_36 = arith.constant 0 : index
    %c0_37 = arith.constant 0 : index
    %129 = vector.load %arg2[%c2, %c0_36, %c0_37] : memref<3x32x128xf32, #tpu.memory_space<vmem>>, vector<1x32x32xf32>
    %130 = vector.shape_cast %129 : vector<1x32x32xf32> to vector<32x32xf32>
    %c2_38 = arith.constant 2 : index
    %c0_39 = arith.constant 0 : index
    %131 = vector.load %arg3[%c2_38, %c0_39] : memref<3x128xf32, #tpu.memory_space<vmem>>, vector<1x32xf32>
    "tpu.trace_start"() <{level = 10 : i32, message = "bmd,de->bme"}> : () -> ()
    %cst_40 = arith.constant dense<0.000000e+00> : vector<2x32x32xf32>
    %132 = tpu.matmul %128, %130, %cst_40 {dimension_numbers = #tpu.dot_dimension_numbers<[2], [0], [0, 1], [1], [0, 0, 0, 1, 1, 1], [], []>} : vector<2x32x32xf32>, vector<32x32xf32>, vector<2x32x32xf32> -> vector<2x32x32xf32>
    "tpu.trace_stop"() : () -> ()
    %133 = vector.shape_cast %131 : vector<1x32xf32> to vector<1x1x32xf32>
    %134 = vector.broadcast %133 : vector<1x1x32xf32> to vector<2x32x32xf32>
    %135 = arith.addf %132, %134 : vector<2x32x32xf32>
    %c0_41 = arith.constant 0 : index
    %c0_42 = arith.constant 0 : index
    %c0_43 = arith.constant 0 : index
    %136 = vector.load %arg4[%c0_41, %c0_42, %c0_43] : memref<2x32x32xf32, #tpu.memory_space<vmem>>, vector<2x32x32xf32>
    tpu.vector_store %arg4[%c0_41, %c0_42, %c0_43], %135 {strides = array<i32>} : memref<2x32x32xf32, #tpu.memory_space<vmem>>, vector<2x32x32xf32>,
    return
  }
}

</mosaic_0001>

<llo_original>
// kernel: cross_attention_n.1
$region0: #{cross_attention_n.1}
  #allocation0 [shape = 'u32[]', space=smem, size = 0x4, offset = 0x4, fixed_abs, tag = 'smem constant byte address 0x4 - core index']
  #allocation1 [shape = 'u32[144,128]{1,0:T(1,128)}', space=vmem, size = 0x12000, scoped, tag = 'internal scratch']
  %s0 = inlined_call_operand.vmem [shape: f32[2,32,32], index: 0, kind: input, shape index: {}]
  %s1 = inlined_call_operand.vmem [shape: f32[2,6,32], index: 1, kind: input, shape index: {}]
  %s2 = inlined_call_operand.vmem [shape: f32[3,32,128], index: 2, kind: input, shape index: {}]
  %s3 = inlined_call_operand.vmem [shape: f32[3,128], index: 3, kind: input, shape index: {}]
  %s4 = inlined_call_operand.hbm [shape: f32[2,32,32], index: 4, kind: output, shape index: {}]
  %s5 = sld [smem:[#allocation0]]
  $region26: #{cross_attention_n.1} parent=0
    _
  %s7 = ssub.s32 1, %s5
  %s8 = scalar_select 0, %s7, %s5
  $region1: #{cross_attention_n.1} parent=0
    #allocation2 [shape = 'u8[32768]{0}', space=vmem, size = 0x8000, scoped, tag = 'output window, operand 0, single buffered']
    #allocation3 [shape = 's32[1]{0}', space=sflag, size = 0x4, scoped, tag = 'scoped memory for cross_attention_n.1']
    %9 = vsyncpa [#allocation3], 0
    // Predicated region
    $region2: #{cross_attention_n.1} parent=1 // pred_check
      _
    $region3: #{cross_attention_n.1} parent=1 // pred_check_branch
      %11 = sbr.rel (0) target = $region5
    $region4: #{cross_attention_n.1} parent=1 // pred_region
      _
    $region5: #{cross_attention_n.1} parent=1 // pred_fallthru
      _
    // Predicated region
    $region6: #{cross_attention_n.1} parent=1 // pred_check
      _
    $region7: #{cross_attention_n.1} parent=1 // pred_check_branch
      %13 = sbr.rel (0) target = $region9
    $region8: #{cross_attention_n.1} parent=1 // pred_region
      _
    $region9: #{cross_attention_n.1} parent=1 // pred_fallthru
      _
    // Predicated region
    $region10: #{cross_attention_n.1} parent=1 // pred_check
      _
    $region11: #{cross_attention_n.1} parent=1 // pred_check_branch
      %15 = sbr.rel (0) target = $region13
    $region12: #{cross_attention_n.1} parent=1 // pred_region
      _
    $region13: #{cross_attention_n.1} parent=1 // pred_fallthru
      _
    // Predicated region
    $region14: #{cross_attention_n.1} parent=1 // pred_check
      _
    $region15: #{cross_attention_n.1} parent=1 // pred_check_branch
      %17 = sbr.rel (0) target = $region17
    $region16: #{cross_attention_n.1} parent=1 // pred_region
      _
    $region17: #{cross_attention_n.1} parent=1 // pred_fallthru
      _
    %v18 = vld [vmem:[%s0] sm:$0xff]
    %v19 = vld [vmem:[%s0 + $0x8] sm:$0xff]
    %v20 = vld [vmem:[%s0 + $0x10] sm:$0xff]
    %v21 = vld [vmem:[%s0 + $0x18] sm:$0xff]
    %v22 = vld [vmem:[%s0 + $0x20] sm:$0xff]
    %v23 = vld [vmem:[%s0 + $0x28] sm:$0xff]
    %v24 = vld [vmem:[%s0 + $0x30] sm:$0xff]
    %v25 = vld [vmem:[%s0 + $0x38] sm:$0xff]
    %v26 = vld [vmem:[%s1] sm:$0x3f]
    %v27 = vld [vmem:[%s1 + $0x8] sm:$0x3f]
    %v28 = vld [vmem:[%s2] sm:$0xff]
    %v29 = vld [vmem:[%s2 + $0x8] sm:$0xff]
    %v30 = vld [vmem:[%s2 + $0x10] sm:$0xff]
    %v31 = vld [vmem:[%s2 + $0x18] sm:$0xff]
    %v32 = vld [vmem:[%s3] sm:$0x1]
    %v33 = vlaneseq
    %v34 = vshrl.u32 %v33, 7
    %v35 = vsub.s32 0, %v34
    %v36 = vrot.slane %v32, %v35
    %vm37 = vcmask 261120
    %v39 = vsel %vm37, %v18, 0
    %v42 = vsel %vm37, %v19, 0
    %v45 = vsel %vm37, %v20, 0
    %v48 = vsel %vm37, %v21, 0
    %v51 = vsel %vm37, %v22, 0
    %v54 = vsel %vm37, %v23, 0
    %v57 = vsel %vm37, %v24, 0
    %v60 = vsel %vm37, %v25, 0
    %62 = vmatprep.subr.mxu0 0.0
    %63 = vmatpush1.msra.mxu0 0.0
    %64 = vmatprep.subr.mxu0 0.0
    %65 = vmatpush1.msra.mxu0 0.0
    %66 = vmatprep.subr.mxu0 0.0
    %67 = vmatpush1.msra.mxu0 0.0
    %68 = vmatprep.subr.mxu0 0.0
    %69 = vmatpush1.msra.mxu0 0.0
    %70 = vmatprep.subr.mxu0 0.0
    %71 = vmatpush1.msra.mxu0 0.0
    %72 = vmatprep.subr.mxu0 0.0
    %73 = vmatpush1.msra.mxu0 0.0
    %74 = vmatprep.subr.mxu0 0.0
    %75 = vmatpush1.msra.mxu0 0.0
    %76 = vmatprep.subr.mxu0 0.0
    %77 = vmatpush1.msra.mxu0 0.0
    %78 = vmatprep.subr.mxu0 0.0
    %79 = vmatpush1.msra.mxu0 0.0
    %80 = vmatprep.subr.mxu0 0.0
    %81 = vmatpush1.msra.mxu0 0.0
    %82 = vmatprep.subr.mxu0 0.0
    %83 = vmatpush1.msra.mxu0 0.0
    %84 = vmatprep.subr.mxu0 0.0
    %85 = vmatpush1.msra.mxu0 0.0
    %86 = vmatprep.subr.mxu0 0.0
    %87 = vmatpush1.msra.mxu0 %v31
    %88 = vmatprep.subr.mxu0 0.0
    %89 = vmatpush1.msra.mxu0 %v30
    %90 = vmatprep.subr.mxu0 0.0
    %91 = vmatpush1.msra.mxu0 %v29
    %92 = vmatprep.subr.mxu0 0.0
    %93 = vmatpush1.msra.mxu0 %v28
    %94 = vmatprep.subr.mxu0 0.0
    %95 = vmatpush2.msra.mxu0 0.0
    %96 = vmatprep.subr.mxu0 0.0
    %97 = vmatpush2.msra.mxu0 0.0
    %98 = vmatprep.subr.mxu0 0.0
    %99 = vmatpush2.msra.mxu0 0.0
    %100 = vmatprep.subr.mxu0 0.0
    %101 = vmatpush2.msra.mxu0 0.0
    %102 = vmatprep.subr.mxu0 0.0
    %103 = vmatpush2.msra.mxu0 0.0
    %104 = vmatprep.subr.mxu0 0.0
    %105 = vmatpush2.msra.mxu0 0.0
    %106 = vmatprep.subr.mxu0 0.0
    %107 = vmatpush2.msra.mxu0 0.0
    %108 = vmatprep.subr.mxu0 0.0
    %109 = vmatpush2.msra.mxu0 0.0
    %110 = vmatprep.subr.mxu0 0.0
    %111 = vmatpush2.msra.mxu0 0.0
    %112 = vmatprep.subr.mxu0 0.0
    %113 = vmatpush2.msra.mxu0 0.0
    %114 = vmatprep.subr.mxu0 0.0
    %115 = vmatpush2.msra.mxu0 0.0
    %116 = vmatprep.subr.mxu0 0.0
    %117 = vmatpush2.msra.mxu0 0.0
    %118 = vmatprep.subr.mxu0 0.0
    %119 = vmatpush2.msra.mxu0 0.0
    %120 = vmatprep.subr.mxu0 0.0
    %121 = vmatpush2.msra.mxu0 0.0
    %122 = vmatprep.subr.mxu0 0.0
    %123 = vmatpush2.msra.mxu0 0.0
    %124 = vmatprep.subr.mxu0 0.0
    %125 = vmatpush2.msra.mxu0 0.0
    %126 = vmatprep.mubr.f32.mxu0 0.0
    %127 = vmatmul.mubr.f32.gmra.mxu0 %v39
    %v128 = vpop.f32.mrf.mxu0
    %v129 = vadd.f32 %v36, %v128
    %v130 = vpop.f32.mrf.mxu0
    %131 = vmatprep.mubr.f32.mxu0 0.0
    %132 = vmatmul.mubr.f32.gmra.mxu0 %v42
    %v133 = vpop.f32.mrf.mxu0
    %v134 = vadd.f32 %v36, %v133
    %v135 = vpop.f32.mrf.mxu0
    %136 = vmatprep.mubr.f32.mxu0 0.0
    %137 = vmatmul.mubr.f32.gmra.mxu0 %v45
    %v138 = vpop.f32.mrf.mxu0
    %v139 = vadd.f32 %v36, %v138
    %v140 = vpop.f32.mrf.mxu0
    %141 = vmatprep.mubr.f32.mxu0 0.0
    %142 = vmatmul.mubr.f32.gmra.mxu0 %v48
    %v143 = vpop.f32.mrf.mxu0
    %v144 = vadd.f32 %v36, %v143
    %v145 = vpop.f32.mrf.mxu0
    %146 = vmatprep.mubr.f32.mxu0 0.0
    %147 = vmatmul.mubr.f32.gmra.mxu0 %v51
    %v148 = vpop.f32.mrf.mxu0
    %v149 = vadd.f32 %v36, %v148
    %v150 = vpop.f32.mrf.mxu0
    %151 = vmatprep.mubr.f32.mxu0 0.0
    %152 = vmatmul.mubr.f32.gmra.mxu0 %v54
    %v153 = vpop.f32.mrf.mxu0
    %v154 = vadd.f32 %v36, %v153
    %v155 = vpop.f32.mrf.mxu0
    %156 = vmatprep.mubr.f32.mxu0 0.0
    %157 = vmatmul.mubr.f32.gmra.mxu0 %v57
    %v158 = vpop.f32.mrf.mxu0
    %v159 = vadd.f32 %v36, %v158
    %v160 = vpop.f32.mrf.mxu0
    %161 = vmatprep.mubr.f32.mxu0 0.0
    %162 = vmatmul.mubr.f32.gmra.mxu0 %v60
    %v163 = vpop.f32.mrf.mxu0
    %v164 = vadd.f32 %v36, %v163
    %v165 = vpop.f32.mrf.mxu0
    %166 = vdwg.mxu0
    %v167 = vlaneseq
    %v168 = vshrl.u32 %v167, 7
    %v169 = vadd.s32 %v168, 8
    %v170 = vadd.s32 %v168, 16
    %v171 = vadd.s32 %v168, 24
    %vm172 = vcmp.lt.s32.totalorder %v168, 0
    %v173 = vsub.s32 0, %v168
    %v174 = vsel %vm172, %v173, %v168
    %v175 = vshrl.u32 %v174, 2
    %v176 = vand.u32 %v174, 3
    %v177 = vsub.s32 0, %v176
    %v178 = vsel %vm172, %v177, %v176
    %vm179 = vcmp.lt.s32.totalorder %v169, 0
    %v180 = vsub.s32 0, %v169
    %v181 = vsel %vm179, %v180, %v169
    %v182 = vshrl.u32 %v181, 2
    %v183 = vand.u32 %v181, 3
    %v184 = vsub.s32 0, %v183
    %v185 = vsel %vm179, %v184, %v183
    %vm186 = vcmp.lt.s32.totalorder %v170, 0
    %v187 = vsub.s32 0, %v170
    %v188 = vsel %vm186, %v187, %v170
    %v189 = vshrl.u32 %v188, 2
    %v190 = vand.u32 %v188, 3
    %v191 = vsub.s32 0, %v190
    %v192 = vsel %vm186, %v191, %v190
    %vm193 = vcmp.lt.s32.totalorder %v171, 0
    %v194 = vsub.s32 0, %v171
    %v195 = vsel %vm193, %v194, %v171
    %v196 = vshrl.u32 %v195, 2
    %v197 = vand.u32 %v195, 3
    %v198 = vsub.s32 0, %v197
    %v199 = vsel %vm193, %v198, %v197
    %vm200 = vcmp.ne.s32.totalorder %v178, 0
    %vm201 = vcmp.ne.s32.totalorder %v185, 0
    %vm202 = vcmp.ne.s32.totalorder %v192, 0
    %vm203 = vcmp.ne.s32.totalorder %v199, 0
    %vm204 = vcmp.lt.s32.totalorder %v178, 0
    %vm205 = vcmp.lt.s32.totalorder %v185, 0
    %vm206 = vcmp.lt.s32.totalorder %v192, 0
    %vm207 = vcmp.lt.s32.totalorder %v199, 0
    %vm208 = vmand %vm204, %vm200
    %vm209 = vmand %vm205, %vm201
    %vm210 = vmand %vm206, %vm202
    %vm211 = vmand %vm207, %vm203
    %v212 = vadd.s32 %v178, 4
    %v213 = vadd.s32 %v185, 4
    %v214 = vadd.s32 %v192, 4
    %v215 = vadd.s32 %v199, 4
    %v216 = vsel %vm208, %v212, %v178
    %v217 = vsel %vm209, %v213, %v185
    %v218 = vsel %vm210, %v214, %v192
    %v219 = vsel %vm211, %v215, %v199
    %vm220 = vcmp.eq.s32.totalorder %v216, 0
    %vm221 = vcmp.eq.s32.totalorder %v217, 0
    %vm222 = vcmp.eq.s32.totalorder %v218, 0
    %vm223 = vcmp.eq.s32.totalorder %v219, 0
    %v224 = vsel %vm220, 1, 0
    %v225 = vsel %vm221, 1, 0
    %v226 = vsel %vm222, 1, 0
    %v227 = vsel %vm223, 1, 0
    %v228 = vcvt.s32.f32 %v224
    %v229 = vcvt.s32.f32 %v225
    %v230 = vcvt.s32.f32 %v226
    %v231 = vcvt.s32.f32 %v227
    %v232 = vmul.f32 %v129, %v228
    %v233 = vmul.f32 %v134, %v229
    %v234 = vmul.f32 %v139, %v230
    %v235 = vmul.f32 %v144, %v231
    %v236 = vmul.f32 %v149, %v228
    %v237 = vmul.f32 %v154, %v229
    %v238 = vmul.f32 %v159, %v230
    %v239 = vmul.f32 %v164, %v231
    %vm240 = vcmp.eq.s32.totalorder %v216, 1
    %vm241 = vcmp.eq.s32.totalorder %v217, 1
    %vm242 = vcmp.eq.s32.totalorder %v218, 1
    %vm243 = vcmp.eq.s32.totalorder %v219, 1
    %v244 = vsel %vm240, 1, 0
    %v245 = vsel %vm241, 1, 0
    %v246 = vsel %vm242, 1, 0
    %v247 = vsel %vm243, 1, 0
    %v248 = vcvt.s32.f32 %v244
    %v249 = vcvt.s32.f32 %v245
    %v250 = vcvt.s32.f32 %v246
    %v251 = vcvt.s32.f32 %v247
    %v252 = vmul.f32 %v129, %v248
    %v253 = vmul.f32 %v134, %v249
    %v254 = vmul.f32 %v139, %v250
    %v255 = vmul.f32 %v144, %v251
    %v256 = vmul.f32 %v149, %v248
    %v257 = vmul.f32 %v154, %v249
    %v258 = vmul.f32 %v159, %v250
    %v259 = vmul.f32 %v164, %v251
    %268 = vrot.lane.b32.xlu0 %v252, 96
    %v269 = vpop.permute.xlu0 %268
    %270 = vrot.lane.b32.xlu0 %v253, 96
    %v271 = vpop.permute.xlu0 %270
    %272 = vrot.lane.b32.xlu0 %v254, 96
    %v273 = vpop.permute.xlu0 %272
    %274 = vrot.lane.b32.xlu0 %v255, 96
    %v275 = vpop.permute.xlu0 %274
    %276 = vrot.lane.b32.xlu0 %v256, 96
    %v277 = vpop.permute.xlu0 %276
    %278 = vrot.lane.b32.xlu0 %v257, 96
    %v279 = vpop.permute.xlu0 %278
    %280 = vrot.lane.b32.xlu0 %v258, 96
    %v281 = vpop.permute.xlu0 %280
    %282 = vrot.lane.b32.xlu0 %v259, 96
    %v283 = vpop.permute.xlu0 %282
    %v292 = vadd.f32 %v232, %v269
    %v293 = vadd.f32 %v233, %v271
    %v294 = vadd.f32 %v234, %v273
    %v295 = vadd.f32 %v235, %v275
    %v296 = vadd.f32 %v236, %v277
    %v297 = vadd.f32 %v237, %v279
    %v298 = vadd.f32 %v238, %v281
    %v299 = vadd.f32 %v239, %v283
    %vm300 = vcmp.eq.s32.totalorder %v216, 2
    %vm301 = vcmp.eq.s32.totalorder %v217, 2
    %vm302 = vcmp.eq.s32.totalorder %v218, 2
    %vm303 = vcmp.eq.s32.totalorder %v219, 2
    %v304 = vsel %vm300, 1, 0
    %v305 = vsel %vm301, 1, 0
    %v306 = vsel %vm302, 1, 0
    %v307 = vsel %vm303, 1, 0
    %v308 = vcvt.s32.f32 %v304
    %v309 = vcvt.s32.f32 %v305
    %v310 = vcvt.s32.f32 %v306
    %v311 = vcvt.s32.f32 %v307
    %v312 = vmul.f32 %v129, %v308
    %v313 = vmul.f32 %v134, %v309
    %v314 = vmul.f32 %v139, %v310
    %v315 = vmul.f32 %v144, %v311
    %v316 = vmul.f32 %v149, %v308
    %v317 = vmul.f32 %v154, %v309
    %v318 = vmul.f32 %v159, %v310
    %v319 = vmul.f32 %v164, %v311
    %328 = vrot.lane.b32.xlu0 %v312, 64
    %v329 = vpop.permute.xlu0 %328
    %330 = vrot.lane.b32.xlu0 %v313, 64
    %v331 = vpop.permute.xlu0 %330
    %332 = vrot.lane.b32.xlu0 %v314, 64
    %v333 = vpop.permute.xlu0 %332
    %334 = vrot.lane.b32.xlu0 %v315, 64
    %v335 = vpop.permute.xlu0 %334
    %336 = vrot.lane.b32.xlu0 %v316, 64
    %v337 = vpop.permute.xlu0 %336
    %338 = vrot.lane.b32.xlu0 %v317, 64
    %v339 = vpop.permute.xlu0 %338
    %340 = vrot.lane.b32.xlu0 %v318, 64
    %v341 = vpop.permute.xlu0 %340
    %342 = vrot.lane.b32.xlu0 %v319, 64
    %v343 = vpop.permute.xlu0 %342
    %v352 = vadd.f32 %v292, %v329
    %v353 = vadd.f32 %v293, %v331
    %v354 = vadd.f32 %v294, %v333
    %v355 = vadd.f32 %v295, %v335
    %v356 = vadd.f32 %v296, %v337
    %v357 = vadd.f32 %v297, %v339
    %v358 = vadd.f32 %v298, %v341
    %v359 = vadd.f32 %v299, %v343
    %vm360 = vcmp.eq.s32.totalorder %v216, 3
    %vm361 = vcmp.eq.s32.totalorder %v217, 3
    %vm362 = vcmp.eq.s32.totalorder %v218, 3
    %vm363 = vcmp.eq.s32.totalorder %v219, 3
    %v364 = vsel %vm360, 1, 0
    %v365 = vsel %vm361, 1, 0
    %v366 = vsel %vm362, 1, 0
    %v367 = vsel %vm363, 1, 0
    %v368 = vcvt.s32.f32 %v364
    %v369 = vcvt.s32.f32 %v365
    %v370 = vcvt.s32.f32 %v366
    %v371 = vcvt.s32.f32 %v367
    %v372 = vmul.f32 %v129, %v368
    %v373 = vmul.f32 %v134, %v369
    %v374 = vmul.f32 %v139, %v370
    %v375 = vmul.f32 %v144, %v371
    %v376 = vmul.f32 %v149, %v368
    %v377 = vmul.f32 %v154, %v369
    %v378 = vmul.f32 %v159, %v370
    %v379 = vmul.f32 %v164, %v371
    %388 = vrot.lane.b32.xlu0 %v372, 32
    %v389 = vpop.permute.xlu0 %388
    %390 = vrot.lane.b32.xlu0 %v373, 32
    %v391 = vpop.permute.xlu0 %390
    %392 = vrot.lane.b32.xlu0 %v374, 32
    %v393 = vpop.permute.xlu0 %392
    %394 = vrot.lane.b32.xlu0 %v375, 32
    %v395 = vpop.permute.xlu0 %394
    %396 = vrot.lane.b32.xlu0 %v376, 32
    %v397 = vpop.permute.xlu0 %396
    %398 = vrot.lane.b32.xlu0 %v377, 32
    %v399 = vpop.permute.xlu0 %398
    %400 = vrot.lane.b32.xlu0 %v378, 32
    %v401 = vpop.permute.xlu0 %400
    %402 = vrot.lane.b32.xlu0 %v379, 32
    %v403 = vpop.permute.xlu0 %402
    %v412 = vadd.f32 %v352, %v389
    %v413 = vadd.f32 %v353, %v391
    %v414 = vadd.f32 %v354, %v393
    %v415 = vadd.f32 %v355, %v395
    %v416 = vadd.f32 %v356, %v397
    %v417 = vadd.f32 %v357, %v399
    %v418 = vadd.f32 %v358, %v401
    %v419 = vadd.f32 %v359, %v403
    %s420 = scalar_lea.vmem %s2, 32
    %v421 = vld [vmem:[%s420] sm:$0xff]
    %v422 = vld [vmem:[%s420 + $0x8] sm:$0xff]
    %v423 = vld [vmem:[%s420 + $0x10] sm:$0xff]
    %v424 = vld [vmem:[%s420 + $0x18] sm:$0xff]
    %v425 = vld [vmem:[%s3 + $0x1] sm:$0x1]
    %v426 = vlaneseq
    %v427 = vshrl.u32 %v426, 7
    %v428 = vsub.s32 0, %v427
    %v429 = vrot.slane %v425, %v428
    %v432 = vcombine.high %v26, %v26
    %v434 = vunpack.c.l.s4 1983009808
    %v435 = vunpack.c.0.s8 %v434
    %v436 = vlaneseq
    %v437 = vshrl.u32 %v436, 7
    %v438 = vsub.s32 %v435, %v437
    %v439 = vrot.slane %v26, %v438
    %v441 = vunpack.c.l.s4 1983009808
    %v442 = vunpack.c.0.s8 %v441
    %v443 = vlaneseq
    %v444 = vshrl.u32 %v443, 7
    %v445 = vsub.s32 %v442, %v444
    %v446 = vrot.slane %v432, %v445
    %v447 = vcombine.high %v439, %v439
    %v448 = vcombine.high %v27, %v27
    %v450 = vunpack.c.l.s4 1983009808
    %v451 = vunpack.c.0.s8 %v450
    %v452 = vlaneseq
    %v453 = vshrl.u32 %v452, 7
    %v454 = vsub.s32 %v451, %v453
    %v455 = vrot.slane %v27, %v454
    %v457 = vunpack.c.l.s4 1983009808
    %v458 = vunpack.c.0.s8 %v457
    %v459 = vlaneseq
    %v460 = vshrl.u32 %v459, 7
    %v461 = vsub.s32 %v458, %v460
    %v462 = vrot.slane %v448, %v461
    %v463 = vcombine.high %v455, %v455
    %v465 = vcombine.high %v429, %v429
    %v467 = vunpack.c.l.s4 1983009808
    %v468 = vunpack.c.0.s8 %v467
    %v469 = vlaneseq
    %v470 = vshrl.u32 %v469, 7
    %v471 = vsub.s32 %v468, %v470
    %v472 = vrot.slane %v429, %v471
    %v474 = vunpack.c.l.s4 1983009808
    %v475 = vunpack.c.0.s8 %v474
    %v476 = vlaneseq
    %v477 = vshrl.u32 %v476, 7
    %v478 = vsub.s32 %v475, %v477
    %v479 = vrot.slane %v465, %v478
    %v480 = vcombine.high %v472, %v472
    %v481 = vcombine.low %v439, %v447
    %v482 = vcombine.low %v446, %v455
    %v484 = vunpack.c.l.s4 1983009808
    %v485 = vunpack.c.0.s8 %v484
    %v486 = vlaneseq
    %v487 = vshrl.u32 %v486, 7
    %v488 = vsub.s32 %v485, %v487
    %v489 = vrot.slane %v481, %v488
    %v491 = vunpack.c.l.s4 1983009808
    %v492 = vunpack.c.0.s8 %v491
    %v493 = vlaneseq
    %v494 = vshrl.u32 %v493, 7
    %v495 = vsub.s32 %v492, %v494
    %v496 = vrot.slane %v482, %v495
    %v497 = vcombine.low %v489, %v496
    %v498 = vcombine.low %v463, %v462
    %v500 = vunpack.c.l.s4 1983009808
    %v501 = vunpack.c.0.s8 %v500
    %v502 = vlaneseq
    %v503 = vshrl.u32 %v502, 7
    %v504 = vsub.s32 %v501, %v503
    %v505 = vrot.slane %v498, %v504
    %v506 = vcombine.low %v472, %v480
    %v507 = vcombine.low %v479, %v472
    %v509 = vunpack.c.l.s4 1983009808
    %v510 = vunpack.c.0.s8 %v509
    %v511 = vlaneseq
    %v512 = vshrl.u32 %v511, 7
    %v513 = vsub.s32 %v510, %v512
    %v514 = vrot.slane %v506, %v513
    %v516 = vunpack.c.l.s4 1983009808
    %v517 = vunpack.c.0.s8 %v516
    %v518 = vlaneseq
    %v519 = vshrl.u32 %v518, 7
    %v520 = vsub.s32 %v517, %v519
    %v521 = vrot.slane %v507, %v520
    %v522 = vcombine.low %v514, %v521
    %v523 = vcombine.low %v480, %v479
    %v525 = vunpack.c.l.s4 1983009808
    %v526 = vunpack.c.0.s8 %v525
    %v527 = vlaneseq
    %v528 = vshrl.u32 %v527, 7
    %v529 = vsub.s32 %v526, %v528
    %v530 = vrot.slane %v523, %v529
    %v533 = vsel %vm37, %v497, 0
    %v535 = vsel %vm37, %v505, 0
    %537 = vmatprep.subr.mxu0 0.0
    %538 = vmatpush1.msra.mxu0 0.0
    %539 = vmatprep.subr.mxu0 0.0
    %540 = vmatpush1.msra.mxu0 0.0
    %541 = vmatprep.subr.mxu0 0.0
    %542 = vmatpush1.msra.mxu0 0.0
    %543 = vmatprep.subr.mxu0 0.0
    %544 = vmatpush1.msra.mxu0 0.0
    %545 = vmatprep.subr.mxu0 0.0
    %546 = vmatpush1.msra.mxu0 0.0
    %547 = vmatprep.subr.mxu0 0.0
    %548 = vmatpush1.msra.mxu0 0.0
    %549 = vmatprep.subr.mxu0 0.0
    %550 = vmatpush1.msra.mxu0 0.0
    %551 = vmatprep.subr.mxu0 0.0
    %552 = vmatpush1.msra.mxu0 0.0
    %553 = vmatprep.subr.mxu0 0.0
    %554 = vmatpush1.msra.mxu0 0.0
    %555 = vmatprep.subr.mxu0 0.0
    %556 = vmatpush1.msra.mxu0 0.0
    %557 = vmatprep.subr.mxu0 0.0
    %558 = vmatpush1.msra.mxu0 0.0
    %559 = vmatprep.subr.mxu0 0.0
    %560 = vmatpush1.msra.mxu0 0.0
    %561 = vmatprep.subr.mxu0 0.0
    %562 = vmatpush1.msra.mxu0 %v424
    %563 = vmatprep.subr.mxu0 0.0
    %564 = vmatpush1.msra.mxu0 %v423
    %565 = vmatprep.subr.mxu0 0.0
    %566 = vmatpush1.msra.mxu0 %v422
    %567 = vmatprep.subr.mxu0 0.0
    %568 = vmatpush1.msra.mxu0 %v421
    %569 = vmatprep.subr.mxu0 0.0
    %570 = vmatpush2.msra.mxu0 0.0
    %571 = vmatprep.subr.mxu0 0.0
    %572 = vmatpush2.msra.mxu0 0.0
    %573 = vmatprep.subr.mxu0 0.0
    %574 = vmatpush2.msra.mxu0 0.0
    %575 = vmatprep.subr.mxu0 0.0
    %576 = vmatpush2.msra.mxu0 0.0
    %577 = vmatprep.subr.mxu0 0.0
    %578 = vmatpush2.msra.mxu0 0.0
    %579 = vmatprep.subr.mxu0 0.0
    %580 = vmatpush2.msra.mxu0 0.0
    %581 = vmatprep.subr.mxu0 0.0
    %582 = vmatpush2.msra.mxu0 0.0
    %583 = vmatprep.subr.mxu0 0.0
    %584 = vmatpush2.msra.mxu0 0.0
    %585 = vmatprep.subr.mxu0 0.0
    %586 = vmatpush2.msra.mxu0 0.0
    %587 = vmatprep.subr.mxu0 0.0
    %588 = vmatpush2.msra.mxu0 0.0
    %589 = vmatprep.subr.mxu0 0.0
    %590 = vmatpush2.msra.mxu0 0.0
    %591 = vmatprep.subr.mxu0 0.0
    %592 = vmatpush2.msra.mxu0 0.0
    %593 = vmatprep.subr.mxu0 0.0
    %594 = vmatpush2.msra.mxu0 0.0
    %595 = vmatprep.subr.mxu0 0.0
    %596 = vmatpush2.msra.mxu0 0.0
    %597 = vmatprep.subr.mxu0 0.0
    %598 = vmatpush2.msra.mxu0 0.0
    %599 = vmatprep.subr.mxu0 0.0
    %600 = vmatpush2.msra.mxu0 0.0
    %601 = vmatprep.mubr.f32.mxu0 0.0
    %602 = vmatmul.mubr.f32.gmra.mxu0 %v533
    %v603 = vpop.f32.mrf.mxu0
    %v604 = vadd.f32 %v522, %v603
    %v605 = vpop.f32.mrf.mxu0
    %606 = vmatprep.mubr.f32.mxu0 0.0
    %607 = vmatmul.mubr.f32.gmra.mxu0 %v535
    %v608 = vpop.f32.mrf.mxu0
    %v609 = vadd.f32 %v530, %v608
    %v610 = vpop.f32.mrf.mxu0
    %611 = vdwg.mxu0
    %v614 = vcombine.high %v604, %v604
    %v616 = vunpack.c.l.s4 1983009808
    %v617 = vunpack.c.0.s8 %v616
    %v618 = vlaneseq
    %v619 = vshrl.u32 %v618, 7
    %v620 = vsub.s32 %v617, %v619
    %v621 = vrot.slane %v604, %v620
    %v623 = vunpack.c.l.s4 1983009808
    %v624 = vunpack.c.0.s8 %v623
    %v625 = vlaneseq
    %v626 = vshrl.u32 %v625, 7
    %v627 = vsub.s32 %v624, %v626
    %v628 = vrot.slane %v614, %v627
    %v629 = vcombine.high %v621, %v621
    %v630 = vcombine.high %v628, %v628
    %v632 = vunpack.c.l.s4 1983009808
    %v633 = vunpack.c.0.s8 %v632
    %v634 = vlaneseq
    %v635 = vshrl.u32 %v634, 7
    %v636 = vsub.s32 %v633, %v635
    %v637 = vrot.slane %v609, %v636
    %v638 = vcombine.high %v637, %v637
    %v639 = vcombine.low %v621, %v629
    %v641 = vunpack.c.l.s4 1983009808
    %v642 = vunpack.c.0.s8 %v641
    %v643 = vlaneseq
    %v644 = vshrl.u32 %v643, 7
    %v645 = vsub.s32 %v642, %v644
    %v646 = vrot.slane %v639, %v645
    %v648 = vunpack.c.l.s4 1983009808
    %v649 = vunpack.c.0.s8 %v648
    %v650 = vlaneseq
    %v651 = vshrl.u32 %v650, 7
    %v652 = vsub.s32 %v649, %v651
    %v653 = vrot.slane %v628, %v652
    %v654 = vcombine.low %v646, %v653
    %vm655 = vcmask 64512
    %v657 = vsel %vm655, %v412, 0
    %v660 = vsel %vm655, %v413, 0
    %v663 = vsel %vm655, %v414, 0
    %v666 = vsel %vm655, %v415, 0
    %v668 = vsel %vm655, %v654, 0
    %670 = vmatprep.subr.mxu0 0.0
    %671 = vmatpush1.xpose.msra.mxu0 0.0
    %672 = vmatprep.subr.mxu0 0.0
    %673 = vmatpush1.xpose.msra.mxu0 0.0
    %674 = vmatprep.subr.mxu0 0.0
    %675 = vmatpush1.xpose.msra.mxu0 0.0
    %676 = vmatprep.subr.mxu0 0.0
    %677 = vmatpush1.xpose.msra.mxu0 0.0
    %678 = vmatprep.subr.mxu0 0.0
    %679 = vmatpush1.xpose.msra.mxu0 0.0
    %680 = vmatprep.subr.mxu0 0.0
    %681 = vmatpush1.xpose.msra.mxu0 0.0
    %682 = vmatprep.subr.mxu0 0.0
    %683 = vmatpush1.xpose.msra.mxu0 0.0
    %684 = vmatprep.subr.mxu0 0.0
    %685 = vmatpush1.xpose.msra.mxu0 0.0
    %686 = vmatprep.subr.mxu0 0.0
    %687 = vmatpush1.xpose.msra.mxu0 0.0
    %688 = vmatprep.subr.mxu0 0.0
    %689 = vmatpush1.xpose.msra.mxu0 0.0
    %690 = vmatprep.subr.mxu0 0.0
    %691 = vmatpush1.xpose.msra.mxu0 0.0
    %692 = vmatprep.subr.mxu0 0.0
    %693 = vmatpush1.xpose.msra.mxu0 0.0
    %694 = vmatprep.subr.mxu0 0.0
    %695 = vmatpush1.xpose.msra.mxu0 0.0
    %696 = vmatprep.subr.mxu0 0.0
    %697 = vmatpush1.xpose.msra.mxu0 0.0
    %698 = vmatprep.subr.mxu0 0.0
    %699 = vmatpush1.xpose.msra.mxu0 0.0
    %700 = vmatprep.subr.mxu0 0.0
    %701 = vmatpush1.xpose.msra.mxu0 %v668
    %702 = vmatprep.subr.mxu0 0.0
    %703 = vmatpush2.xpose.msra.mxu0 0.0
    %704 = vmatprep.subr.mxu0 0.0
    %705 = vmatpush2.xpose.msra.mxu0 0.0
    %706 = vmatprep.subr.mxu0 0.0
    %707 = vmatpush2.xpose.msra.mxu0 0.0
    %708 = vmatprep.subr.mxu0 0.0
    %709 = vmatpush2.xpose.msra.mxu0 0.0
    %710 = vmatprep.subr.mxu0 0.0
    %711 = vmatpush2.xpose.msra.mxu0 0.0
    %712 = vmatprep.subr.mxu0 0.0
    %713 = vmatpush2.xpose.msra.mxu0 0.0
    %714 = vmatprep.subr.mxu0 0.0
    %715 = vmatpush2.xpose.msra.mxu0 0.0
    %716 = vmatprep.subr.mxu0 0.0
    %717 = vmatpush2.xpose.msra.mxu0 0.0
    %718 = vmatprep.subr.mxu0 0.0
    %719 = vmatpush2.xpose.msra.mxu0 0.0
    %720 = vmatprep.subr.mxu0 0.0
    %721 = vmatpush2.xpose.msra.mxu0 0.0
    %722 = vmatprep.subr.mxu0 0.0
    %723 = vmatpush2.xpose.msra.mxu0 0.0
    %724 = vmatprep.subr.mxu0 0.0
    %725 = vmatpush2.xpose.msra.mxu0 0.0
    %726 = vmatprep.subr.mxu0 0.0
    %727 = vmatpush2.xpose.msra.mxu0 0.0
    %728 = vmatprep.subr.mxu0 0.0
    %729 = vmatpush2.xpose.msra.mxu0 0.0
    %730 = vmatprep.subr.mxu0 0.0
    %731 = vmatpush2.xpose.msra.mxu0 0.0
    %732 = vmatprep.subr.mxu0 0.0
    %733 = vmatpush2.xpose.msra.mxu0 0.0
    %734 = vmatprep.mubr.f32.mxu0 0.0
    %735 = vmatmul.mubr.f32.gmra.mxu0 %v657
    %v736 = vpop.f32.mrf.mxu0
    %v737 = vadd.f32 0.0, %v736
    %v738 = vpop.f32.mrf.mxu0
    %739 = vmatprep.mubr.f32.mxu0 0.0
    %740 = vmatmul.mubr.f32.gmra.mxu0 %v660
    %v741 = vpop.f32.mrf.mxu0
    %v742 = vadd.f32 0.0, %v741
    %v743 = vpop.f32.mrf.mxu0
    %744 = vmatprep.mubr.f32.mxu0 0.0
    %745 = vmatmul.mubr.f32.gmra.mxu0 %v663
    %v746 = vpop.f32.mrf.mxu0
    %v747 = vadd.f32 0.0, %v746
    %v748 = vpop.f32.mrf.mxu0
    %749 = vmatprep.mubr.f32.mxu0 0.0
    %750 = vmatmul.mubr.f32.gmra.mxu0 %v666
    %v751 = vpop.f32.mrf.mxu0
    %v752 = vadd.f32 0.0, %v751
    %v753 = vpop.f32.mrf.mxu0
    %754 = vdwg.mxu0
    %v755 = vcombine.low %v630, %v637
    %v757 = vunpack.c.l.s4 1983009808
    %v758 = vunpack.c.0.s8 %v757
    %v759 = vlaneseq
    %v760 = vshrl.u32 %v759, 7
    %v761 = vsub.s32 %v758, %v760
    %v762 = vrot.slane %v755, %v761
    %v764 = vunpack.c.l.s4 1983009808
    %v765 = vunpack.c.0.s8 %v764
    %v766 = vlaneseq
    %v767 = vshrl.u32 %v766, 7
    %v768 = vsub.s32 %v765, %v767
    %v769 = vrot.slane %v638, %v768
    %v770 = vcombine.low %v762, %v769
    %v772 = vsel %vm655, %v416, 0
    %v775 = vsel %vm655, %v417, 0
    %v778 = vsel %vm655, %v418, 0
    %v781 = vsel %vm655, %v419, 0
    %v783 = vsel %vm655, %v770, 0
    %785 = vmatprep.subr.mxu0 0.0
    %786 = vmatpush1.xpose.msra.mxu0 0.0
    %787 = vmatprep.subr.mxu0 0.0
    %788 = vmatpush1.xpose.msra.mxu0 0.0
    %789 = vmatprep.subr.mxu0 0.0
    %790 = vmatpush1.xpose.msra.mxu0 0.0
    %791 = vmatprep.subr.mxu0 0.0
    %792 = vmatpush1.xpose.msra.mxu0 0.0
    %793 = vmatprep.subr.mxu0 0.0
    %794 = vmatpush1.xpose.msra.mxu0 0.0
    %795 = vmatprep.subr.mxu0 0.0
    %796 = vmatpush1.xpose.msra.mxu0 0.0
    %797 = vmatprep.subr.mxu0 0.0
    %798 = vmatpush1.xpose.msra.mxu0 0.0
    %799 = vmatprep.subr.mxu0 0.0
    %800 = vmatpush1.xpose.msra.mxu0 0.0
    %801 = vmatprep.subr.mxu0 0.0
    %802 = vmatpush1.xpose.msra.mxu0 0.0
    %803 = vmatprep.subr.mxu0 0.0
    %804 = vmatpush1.xpose.msra.mxu0 0.0
    %805 = vmatprep.subr.mxu0 0.0
    %806 = vmatpush1.xpose.msra.mxu0 0.0
    %807 = vmatprep.subr.mxu0 0.0
    %808 = vmatpush1.xpose.msra.mxu0 0.0
    %809 = vmatprep.subr.mxu0 0.0
    %810 = vmatpush1.xpose.msra.mxu0 0.0
    %811 = vmatprep.subr.mxu0 0.0
    %812 = vmatpush1.xpose.msra.mxu0 0.0
    %813 = vmatprep.subr.mxu0 0.0
    %814 = vmatpush1.xpose.msra.mxu0 0.0
    %815 = vmatprep.subr.mxu0 0.0
    %816 = vmatpush1.xpose.msra.mxu0 %v783
    %817 = vmatprep.subr.mxu0 0.0
    %818 = vmatpush2.xpose.msra.mxu0 0.0
    %819 = vmatprep.subr.mxu0 0.0
    %820 = vmatpush2.xpose.msra.mxu0 0.0
    %821 = vmatprep.subr.mxu0 0.0
    %822 = vmatpush2.xpose.msra.mxu0 0.0
    %823 = vmatprep.subr.mxu0 0.0
    %824 = vmatpush2.xpose.msra.mxu0 0.0
    %825 = vmatprep.subr.mxu0 0.0
    %826 = vmatpush2.xpose.msra.mxu0 0.0
    %827 = vmatprep.subr.mxu0 0.0
    %828 = vmatpush2.xpose.msra.mxu0 0.0
    %829 = vmatprep.subr.mxu0 0.0
    %830 = vmatpush2.xpose.msra.mxu0 0.0
    %831 = vmatprep.subr.mxu0 0.0
    %832 = vmatpush2.xpose.msra.mxu0 0.0
    %833 = vmatprep.subr.mxu0 0.0
    %834 = vmatpush2.xpose.msra.mxu0 0.0
    %835 = vmatprep.subr.mxu0 0.0
    %836 = vmatpush2.xpose.msra.mxu0 0.0
    %837 = vmatprep.subr.mxu0 0.0
    %838 = vmatpush2.xpose.msra.mxu0 0.0
    %839 = vmatprep.subr.mxu0 0.0
    %840 = vmatpush2.xpose.msra.mxu0 0.0
    %841 = vmatprep.subr.mxu0 0.0
    %842 = vmatpush2.xpose.msra.mxu0 0.0
    %843 = vmatprep.subr.mxu0 0.0
    %844 = vmatpush2.xpose.msra.mxu0 0.0
    %845 = vmatprep.subr.mxu0 0.0
    %846 = vmatpush2.xpose.msra.mxu0 0.0
    %847 = vmatprep.subr.mxu0 0.0
    %848 = vmatpush2.xpose.msra.mxu0 0.0
    %849 = vmatprep.mubr.f32.mxu0 0.0
    %850 = vmatmul.mubr.f32.gmra.mxu0 %v772
    %v851 = vpop.f32.mrf.mxu0
    %v852 = vadd.f32 0.0, %v851
    %v853 = vpop.f32.mrf.mxu0
    %854 = vmatprep.mubr.f32.mxu0 0.0
    %855 = vmatmul.mubr.f32.gmra.mxu0 %v775
    %v856 = vpop.f32.mrf.mxu0
    %v857 = vadd.f32 0.0, %v856
    %v858 = vpop.f32.mrf.mxu0
    %859 = vmatprep.mubr.f32.mxu0 0.0
    %860 = vmatmul.mubr.f32.gmra.mxu0 %v778
    %v861 = vpop.f32.mrf.mxu0
    %v862 = vadd.f32 0.0, %v861
    %v863 = vpop.f32.mrf.mxu0
    %864 = vmatprep.mubr.f32.mxu0 0.0
    %865 = vmatmul.mubr.f32.gmra.mxu0 %v781
    %v866 = vpop.f32.mrf.mxu0
    %v867 = vadd.f32 0.0, %v866
    %v868 = vpop.f32.mrf.mxu0
    %869 = vdwg.mxu0
    %vm870 = vcmask 48128
    %v871 = vsel %vm870, %v737, -inf
    %872 = vmax.xlane.f32.xlu0 %v871
    %v873 = vpop.xlane.xlu0 %872
    %v874 = vsel %vm870, %v742, -inf
    %875 = vmax.xlane.f32.xlu0 %v874
    %v876 = vpop.xlane.xlu0 %875
    %v877 = vsel %vm870, %v747, -inf
    %878 = vmax.xlane.f32.xlu0 %v877
    %v879 = vpop.xlane.xlu0 %878
    %v880 = vsel %vm870, %v752, -inf
    %881 = vmax.xlane.f32.xlu0 %v880
    %v882 = vpop.xlane.xlu0 %881
    %v883 = vsel %vm870, %v852, -inf
    %884 = vmax.xlane.f32.xlu0 %v883
    %v885 = vpop.xlane.xlu0 %884
    %v886 = vsel %vm870, %v857, -inf
    %887 = vmax.xlane.f32.xlu0 %v886
    %v888 = vpop.xlane.xlu0 %887
    %v889 = vsel %vm870, %v862, -inf
    %890 = vmax.xlane.f32.xlu0 %v889
    %v891 = vpop.xlane.xlu0 %890
    %v892 = vsel %vm870, %v867, -inf
    %893 = vmax.xlane.f32.xlu0 %v892
    %v894 = vpop.xlane.xlu0 %893
    %v895 = vsub.f32 %v737, %v873
    %v896 = vsub.f32 %v742, %v876
    %v897 = vsub.f32 %v747, %v879
    %v898 = vsub.f32 %v752, %v882
    %v899 = vsub.f32 %v852, %v885
    %v900 = vsub.f32 %v857, %v888
    %v901 = vsub.f32 %v862, %v891
    %v902 = vsub.f32 %v867, %v894
    %v903 = vmul.f32 %v895, 1.442695
    %v904 = vpow.pop %v903
    %v905 = vmul.f32 %v896, 1.442695
    %v906 = vpow.pop %v905
    %v907 = vmul.f32 %v897, 1.442695
    %v908 = vpow.pop %v907
    %v909 = vmul.f32 %v898, 1.442695
    %v910 = vpow.pop %v909
    %v911 = vmul.f32 %v899, 1.442695
    %v912 = vpow.pop %v911
    %v913 = vmul.f32 %v900, 1.442695
    %v914 = vpow.pop %v913
    %v915 = vmul.f32 %v901, 1.442695
    %v916 = vpow.pop %v915
    %v917 = vmul.f32 %v902, 1.442695
    %v918 = vpow.pop %v917
    %v919 = vsel %vm870, %v904, 0.0
    %920 = vadd.xlane.f32.xlu0 %v919
    %v921 = vpop.xlane.xlu0 %920
    %v922 = vsel %vm870, %v906, 0.0
    %923 = vadd.xlane.f32.xlu0 %v922
    %v924 = vpop.xlane.xlu0 %923
    %v925 = vsel %vm870, %v908, 0.0
    %926 = vadd.xlane.f32.xlu0 %v925
    %v927 = vpop.xlane.xlu0 %926
    %v928 = vsel %vm870, %v910, 0.0
    %929 = vadd.xlane.f32.xlu0 %v928
    %v930 = vpop.xlane.xlu0 %929
    %v931 = vsel %vm870, %v912, 0.0
    %932 = vadd.xlane.f32.xlu0 %v931
    %v933 = vpop.xlane.xlu0 %932
    %v934 = vsel %vm870, %v914, 0.0
    %935 = vadd.xlane.f32.xlu0 %v934
    %v936 = vpop.xlane.xlu0 %935
    %v937 = vsel %vm870, %v916, 0.0
    %938 = vadd.xlane.f32.xlu0 %v937
    %v939 = vpop.xlane.xlu0 %938
    %v940 = vsel %vm870, %v918, 0.0
    %941 = vadd.xlane.f32.xlu0 %v940
    %v942 = vpop.xlane.xlu0 %941
    %v943 = vrcp.pop %v921
    %v944 = vrcp.pop %v924
    %v945 = vrcp.pop %v927
    %v946 = vrcp.pop %v930
    %v947 = vrcp.pop %v933
    %v948 = vrcp.pop %v936
    %v949 = vrcp.pop %v939
    %v950 = vrcp.pop %v942
    %v951 = vmul.f32 %v904, %v943
    %v952 = vmul.f32 %v906, %v944
    %v953 = vmul.f32 %v908, %v945
    %v954 = vmul.f32 %v910, %v946
    %v955 = vmul.f32 %v912, %v947
    %v956 = vmul.f32 %v914, %v948
    %v957 = vmul.f32 %v916, %v949
    %v958 = vmul.f32 %v918, %v950
    %959 = vrot.lane.b32.xlu0 %v654, 96
    %v960 = vpop.permute.xlu0 %959
    %v962 = vsel %vm870, %v951, 0
    %v965 = vsel %vm870, %v952, 0
    %v968 = vsel %vm870, %v953, 0
    %v971 = vsel %vm870, %v954, 0
    %vm973 = vcmask 1045504
    %v974 = vsel %vm973, %v960, 0
    %976 = vmatprep.subr.mxu0 0.0
    %977 = vmatpush1.msra.mxu0 0.0
    %978 = vmatprep.subr.mxu0 0.0
    %979 = vmatpush1.msra.mxu0 0.0
    %980 = vmatprep.subr.mxu0 0.0
    %981 = vmatpush1.msra.mxu0 0.0
    %982 = vmatprep.subr.mxu0 0.0
    %983 = vmatpush1.msra.mxu0 0.0
    %984 = vmatprep.subr.mxu0 0.0
    %985 = vmatpush1.msra.mxu0 0.0
    %986 = vmatprep.subr.mxu0 0.0
    %987 = vmatpush1.msra.mxu0 0.0
    %988 = vmatprep.subr.mxu0 0.0
    %989 = vmatpush1.msra.mxu0 0.0
    %990 = vmatprep.subr.mxu0 0.0
    %991 = vmatpush1.msra.mxu0 0.0
    %992 = vmatprep.subr.mxu0 0.0
    %993 = vmatpush1.msra.mxu0 0.0
    %994 = vmatprep.subr.mxu0 0.0
    %995 = vmatpush1.msra.mxu0 0.0
    %996 = vmatprep.subr.mxu0 0.0
    %997 = vmatpush1.msra.mxu0 0.0
    %998 = vmatprep.subr.mxu0 0.0
    %999 = vmatpush1.msra.mxu0 0.0
    %1000 = vmatprep.subr.mxu0 0.0
    %1001 = vmatpush1.msra.mxu0 0.0
    %1002 = vmatprep.subr.mxu0 0.0
    %1003 = vmatpush1.msra.mxu0 0.0
    %1004 = vmatprep.subr.mxu0 0.0
    %1005 = vmatpush1.msra.mxu0 0.0
    %1006 = vmatprep.subr.mxu0 0.0
    %1007 = vmatpush1.msra.mxu0 %v974
    %1008 = vmatprep.subr.mxu0 0.0
    %1009 = vmatpush2.msra.mxu0 0.0
    %1010 = vmatprep.subr.mxu0 0.0
    %1011 = vmatpush2.msra.mxu0 0.0
    %1012 = vmatprep.subr.mxu0 0.0
    %1013 = vmatpush2.msra.mxu0 0.0
    %1014 = vmatprep.subr.mxu0 0.0
    %1015 = vmatpush2.msra.mxu0 0.0
    %1016 = vmatprep.subr.mxu0 0.0
    %1017 = vmatpush2.msra.mxu0 0.0
    %1018 = vmatprep.subr.mxu0 0.0
    %1019 = vmatpush2.msra.mxu0 0.0
    %1020 = vmatprep.subr.mxu0 0.0
    %1021 = vmatpush2.msra.mxu0 0.0
    %1022 = vmatprep.subr.mxu0 0.0
    %1023 = vmatpush2.msra.mxu0 0.0
    %1024 = vmatprep.subr.mxu0 0.0
    %1025 = vmatpush2.msra.mxu0 0.0
    %1026 = vmatprep.subr.mxu0 0.0
    %1027 = vmatpush2.msra.mxu0 0.0
    %1028 = vmatprep.subr.mxu0 0.0
    %1029 = vmatpush2.msra.mxu0 0.0
    %1030 = vmatprep.subr.mxu0 0.0
    %1031 = vmatpush2.msra.mxu0 0.0
    %1032 = vmatprep.subr.mxu0 0.0
    %1033 = vmatpush2.msra.mxu0 0.0
    %1034 = vmatprep.subr.mxu0 0.0
    %1035 = vmatpush2.msra.mxu0 0.0
    %1036 = vmatprep.subr.mxu0 0.0
    %1037 = vmatpush2.msra.mxu0 0.0
    %1038 = vmatprep.subr.mxu0 0.0
    %1039 = vmatpush2.msra.mxu0 0.0
    %1040 = vmatprep.mubr.f32.mxu0 0.0
    %1041 = vmatmul.mubr.f32.gmra.mxu0 %v962
    %v1042 = vpop.f32.mrf.mxu0
    %v1043 = vadd.f32 0.0, %v1042
    %v1044 = vpop.f32.mrf.mxu0
    %1045 = vmatprep.mubr.f32.mxu0 0.0
    %1046 = vmatmul.mubr.f32.gmra.mxu0 %v965
    %v1047 = vpop.f32.mrf.mxu0
    %v1048 = vadd.f32 0.0, %v1047
    %v1049 = vpop.f32.mrf.mxu0
    %1050 = vmatprep.mubr.f32.mxu0 0.0
    %1051 = vmatmul.mubr.f32.gmra.mxu0 %v968
    %v1052 = vpop.f32.mrf.mxu0
    %v1053 = vadd.f32 0.0, %v1052
    %v1054 = vpop.f32.mrf.mxu0
    %1055 = vmatprep.mubr.f32.mxu0 0.0
    %1056 = vmatmul.mubr.f32.gmra.mxu0 %v971
    %v1057 = vpop.f32.mrf.mxu0
    %v1058 = vadd.f32 0.0, %v1057
    %v1059 = vpop.f32.mrf.mxu0
    %1060 = vdwg.mxu0
    %1061 = vrot.lane.b32.xlu0 %v770, 96
    %v1062 = vpop.permute.xlu0 %1061
    %v1064 = vsel %vm870, %v955, 0
    %v1067 = vsel %vm870, %v956, 0
    %v1070 = vsel %vm870, %v957, 0
    %v1073 = vsel %vm870, %v958, 0
    %v1075 = vsel %vm973, %v1062, 0
    %1077 = vmatprep.subr.mxu0 0.0
    %1078 = vmatpush1.msra.mxu0 0.0
    %1079 = vmatprep.subr.mxu0 0.0
    %1080 = vmatpush1.msra.mxu0 0.0
    %1081 = vmatprep.subr.mxu0 0.0
    %1082 = vmatpush1.msra.mxu0 0.0
    %1083 = vmatprep.subr.mxu0 0.0
    %1084 = vmatpush1.msra.mxu0 0.0
    %1085 = vmatprep.subr.mxu0 0.0
    %1086 = vmatpush1.msra.mxu0 0.0
    %1087 = vmatprep.subr.mxu0 0.0
    %1088 = vmatpush1.msra.mxu0 0.0
    %1089 = vmatprep.subr.mxu0 0.0
    %1090 = vmatpush1.msra.mxu0 0.0
    %1091 = vmatprep.subr.mxu0 0.0
    %1092 = vmatpush1.msra.mxu0 0.0
    %1093 = vmatprep.subr.mxu0 0.0
    %1094 = vmatpush1.msra.mxu0 0.0
    %1095 = vmatprep.subr.mxu0 0.0
    %1096 = vmatpush1.msra.mxu0 0.0
    %1097 = vmatprep.subr.mxu0 0.0
    %1098 = vmatpush1.msra.mxu0 0.0
    %1099 = vmatprep.subr.mxu0 0.0
    %1100 = vmatpush1.msra.mxu0 0.0
    %1101 = vmatprep.subr.mxu0 0.0
    %1102 = vmatpush1.msra.mxu0 0.0
    %1103 = vmatprep.subr.mxu0 0.0
    %1104 = vmatpush1.msra.mxu0 0.0
    %1105 = vmatprep.subr.mxu0 0.0
    %1106 = vmatpush1.msra.mxu0 0.0
    %1107 = vmatprep.subr.mxu0 0.0
    %1108 = vmatpush1.msra.mxu0 %v1075
    %1109 = vmatprep.subr.mxu0 0.0
    %1110 = vmatpush2.msra.mxu0 0.0
    %1111 = vmatprep.subr.mxu0 0.0
    %1112 = vmatpush2.msra.mxu0 0.0
    %1113 = vmatprep.subr.mxu0 0.0
    %1114 = vmatpush2.msra.mxu0 0.0
    %1115 = vmatprep.subr.mxu0 0.0
    %1116 = vmatpush2.msra.mxu0 0.0
    %1117 = vmatprep.subr.mxu0 0.0
    %1118 = vmatpush2.msra.mxu0 0.0
    %1119 = vmatprep.subr.mxu0 0.0
    %1120 = vmatpush2.msra.mxu0 0.0
    %1121 = vmatprep.subr.mxu0 0.0
    %1122 = vmatpush2.msra.mxu0 0.0
    %1123 = vmatprep.subr.mxu0 0.0
    %1124 = vmatpush2.msra.mxu0 0.0
    %1125 = vmatprep.subr.mxu0 0.0
    %1126 = vmatpush2.msra.mxu0 0.0
    %1127 = vmatprep.subr.mxu0 0.0
    %1128 = vmatpush2.msra.mxu0 0.0
    %1129 = vmatprep.subr.mxu0 0.0
    %1130 = vmatpush2.msra.mxu0 0.0
    %1131 = vmatprep.subr.mxu0 0.0
    %1132 = vmatpush2.msra.mxu0 0.0
    %1133 = vmatprep.subr.mxu0 0.0
    %1134 = vmatpush2.msra.mxu0 0.0
    %1135 = vmatprep.subr.mxu0 0.0
    %1136 = vmatpush2.msra.mxu0 0.0
    %1137 = vmatprep.subr.mxu0 0.0
    %1138 = vmatpush2.msra.mxu0 0.0
    %1139 = vmatprep.subr.mxu0 0.0
    %1140 = vmatpush2.msra.mxu0 0.0
    %1141 = vmatprep.mubr.f32.mxu0 0.0
    %1142 = vmatmul.mubr.f32.gmra.mxu0 %v1064
    %v1143 = vpop.f32.mrf.mxu0
    %v1144 = vadd.f32 0.0, %v1143
    %v1145 = vpop.f32.mrf.mxu0
    %1146 = vmatprep.mubr.f32.mxu0 0.0
    %1147 = vmatmul.mubr.f32.gmra.mxu0 %v1067
    %v1148 = vpop.f32.mrf.mxu0
    %v1149 = vadd.f32 0.0, %v1148
    %v1150 = vpop.f32.mrf.mxu0
    %1151 = vmatprep.mubr.f32.mxu0 0.0
    %1152 = vmatmul.mubr.f32.gmra.mxu0 %v1070
    %v1153 = vpop.f32.mrf.mxu0
    %v1154 = vadd.f32 0.0, %v1153
    %v1155 = vpop.f32.mrf.mxu0
    %1156 = vmatprep.mubr.f32.mxu0 0.0
    %1157 = vmatmul.mubr.f32.gmra.mxu0 %v1073
    %v1158 = vpop.f32.mrf.mxu0
    %v1159 = vadd.f32 0.0, %v1158
    %v1160 = vpop.f32.mrf.mxu0
    %1161 = vdwg.mxu0
    %1162 = vrot.lane.b32.xlu0 %v412, 120
    %v1163 = vpop.permute.xlu0 %1162
    %1164 = vrot.lane.b32.xlu0 %v413, 120
    %v1165 = vpop.permute.xlu0 %1164
    %1166 = vrot.lane.b32.xlu0 %v414, 120
    %v1167 = vpop.permute.xlu0 %1166
    %1168 = vrot.lane.b32.xlu0 %v415, 120
    %v1169 = vpop.permute.xlu0 %1168
    %1170 = vrot.lane.b32.xlu0 %v654, 120
    %v1171 = vpop.permute.xlu0 %1170
    %v1172 = vsel %vm655, %v1163, 0
    %v1174 = vsel %vm655, %v1165, 0
    %v1176 = vsel %vm655, %v1167, 0
    %v1178 = vsel %vm655, %v1169, 0
    %v1180 = vsel %vm655, %v1171, 0
    %1182 = vmatprep.subr.mxu0 0.0
    %1183 = vmatpush1.xpose.msra.mxu0 0.0
    %1184 = vmatprep.subr.mxu0 0.0
    %1185 = vmatpush1.xpose.msra.mxu0 0.0
    %1186 = vmatprep.subr.mxu0 0.0
    %1187 = vmatpush1.xpose.msra.mxu0 0.0
    %1188 = vmatprep.subr.mxu0 0.0
    %1189 = vmatpush1.xpose.msra.mxu0 0.0
    %1190 = vmatprep.subr.mxu0 0.0
    %1191 = vmatpush1.xpose.msra.mxu0 0.0
    %1192 = vmatprep.subr.mxu0 0.0
    %1193 = vmatpush1.xpose.msra.mxu0 0.0
    %1194 = vmatprep.subr.mxu0 0.0
    %1195 = vmatpush1.xpose.msra.mxu0 0.0
    %1196 = vmatprep.subr.mxu0 0.0
    %1197 = vmatpush1.xpose.msra.mxu0 0.0
    %1198 = vmatprep.subr.mxu0 0.0
    %1199 = vmatpush1.xpose.msra.mxu0 0.0
    %1200 = vmatprep.subr.mxu0 0.0
    %1201 = vmatpush1.xpose.msra.mxu0 0.0
    %1202 = vmatprep.subr.mxu0 0.0
    %1203 = vmatpush1.xpose.msra.mxu0 0.0
    %1204 = vmatprep.subr.mxu0 0.0
    %1205 = vmatpush1.xpose.msra.mxu0 0.0
    %1206 = vmatprep.subr.mxu0 0.0
    %1207 = vmatpush1.xpose.msra.mxu0 0.0
    %1208 = vmatprep.subr.mxu0 0.0
    %1209 = vmatpush1.xpose.msra.mxu0 0.0
    %1210 = vmatprep.subr.mxu0 0.0
    %1211 = vmatpush1.xpose.msra.mxu0 0.0
    %1212 = vmatprep.subr.mxu0 0.0
    %1213 = vmatpush1.xpose.msra.mxu0 %v1180
    %1214 = vmatprep.subr.mxu0 0.0
    %1215 = vmatpush2.xpose.msra.mxu0 0.0
    %1216 = vmatprep.subr.mxu0 0.0
    %1217 = vmatpush2.xpose.msra.mxu0 0.0
    %1218 = vmatprep.subr.mxu0 0.0
    %1219 = vmatpush2.xpose.msra.mxu0 0.0
    %1220 = vmatprep.subr.mxu0 0.0
    %1221 = vmatpush2.xpose.msra.mxu0 0.0
    %1222 = vmatprep.subr.mxu0 0.0
    %1223 = vmatpush2.xpose.msra.mxu0 0.0
    %1224 = vmatprep.subr.mxu0 0.0
    %1225 = vmatpush2.xpose.msra.mxu0 0.0
    %1226 = vmatprep.subr.mxu0 0.0
    %1227 = vmatpush2.xpose.msra.mxu0 0.0
    %1228 = vmatprep.subr.mxu0 0.0
    %1229 = vmatpush2.xpose.msra.mxu0 0.0
    %1230 = vmatprep.subr.mxu0 0.0
    %1231 = vmatpush2.xpose.msra.mxu0 0.0
    %1232 = vmatprep.subr.mxu0 0.0
    %1233 = vmatpush2.xpose.msra.mxu0 0.0
    %1234 = vmatprep.subr.mxu0 0.0
    %1235 = vmatpush2.xpose.msra.mxu0 0.0
    %1236 = vmatprep.subr.mxu0 0.0
    %1237 = vmatpush2.xpose.msra.mxu0 0.0
    %1238 = vmatprep.subr.mxu0 0.0
    %1239 = vmatpush2.xpose.msra.mxu0 0.0
    %1240 = vmatprep.subr.mxu0 0.0
    %1241 = vmatpush2.xpose.msra.mxu0 0.0
    %1242 = vmatprep.subr.mxu0 0.0
    %1243 = vmatpush2.xpose.msra.mxu0 0.0
    %1244 = vmatprep.subr.mxu0 0.0
    %1245 = vmatpush2.xpose.msra.mxu0 0.0
    %1246 = vmatprep.mubr.f32.mxu0 0.0
    %1247 = vmatmul.mubr.f32.gmra.mxu0 %v1172
    %v1248 = vpop.f32.mrf.mxu0
    %v1249 = vadd.f32 0.0, %v1248
    %v1250 = vpop.f32.mrf.mxu0
    %1251 = vmatprep.mubr.f32.mxu0 0.0
    %1252 = vmatmul.mubr.f32.gmra.mxu0 %v1174
    %v1253 = vpop.f32.mrf.mxu0
    %v1254 = vadd.f32 0.0, %v1253
    %v1255 = vpop.f32.mrf.mxu0
    %1256 = vmatprep.mubr.f32.mxu0 0.0
    %1257 = vmatmul.mubr.f32.gmra.mxu0 %v1176
    %v1258 = vpop.f32.mrf.mxu0
    %v1259 = vadd.f32 0.0, %v1258
    %v1260 = vpop.f32.mrf.mxu0
    %1261 = vmatprep.mubr.f32.mxu0 0.0
    %1262 = vmatmul.mubr.f32.gmra.mxu0 %v1178
    %v1263 = vpop.f32.mrf.mxu0
    %v1264 = vadd.f32 0.0, %v1263
    %v1265 = vpop.f32.mrf.mxu0
    %1266 = vdwg.mxu0
    %1267 = vrot.lane.b32.xlu0 %v416, 120
    %v1268 = vpop.permute.xlu0 %1267
    %1269 = vrot.lane.b32.xlu0 %v417, 120
    %v1270 = vpop.permute.xlu0 %1269
    %1271 = vrot.lane.b32.xlu0 %v418, 120
    %v1272 = vpop.permute.xlu0 %1271
    %1273 = vrot.lane.b32.xlu0 %v419, 120
    %v1274 = vpop.permute.xlu0 %1273
    %1275 = vrot.lane.b32.xlu0 %v770, 120
    %v1276 = vpop.permute.xlu0 %1275
    %v1277 = vsel %vm655, %v1268, 0
    %v1279 = vsel %vm655, %v1270, 0
    %v1281 = vsel %vm655, %v1272, 0
    %v1283 = vsel %vm655, %v1274, 0
    %v1285 = vsel %vm655, %v1276, 0
    %1287 = vmatprep.subr.mxu0 0.0
    %1288 = vmatpush1.xpose.msra.mxu0 0.0
    %1289 = vmatprep.subr.mxu0 0.0
    %1290 = vmatpush1.xpose.msra.mxu0 0.0
    %1291 = vmatprep.subr.mxu0 0.0
    %1292 = vmatpush1.xpose.msra.mxu0 0.0
    %1293 = vmatprep.subr.mxu0 0.0
    %1294 = vmatpush1.xpose.msra.mxu0 0.0
    %1295 = vmatprep.subr.mxu0 0.0
    %1296 = vmatpush1.xpose.msra.mxu0 0.0
    %1297 = vmatprep.subr.mxu0 0.0
    %1298 = vmatpush1.xpose.msra.mxu0 0.0
    %1299 = vmatprep.subr.mxu0 0.0
    %1300 = vmatpush1.xpose.msra.mxu0 0.0
    %1301 = vmatprep.subr.mxu0 0.0
    %1302 = vmatpush1.xpose.msra.mxu0 0.0
    %1303 = vmatprep.subr.mxu0 0.0
    %1304 = vmatpush1.xpose.msra.mxu0 0.0
    %1305 = vmatprep.subr.mxu0 0.0
    %1306 = vmatpush1.xpose.msra.mxu0 0.0
    %1307 = vmatprep.subr.mxu0 0.0
    %1308 = vmatpush1.xpose.msra.mxu0 0.0
    %1309 = vmatprep.subr.mxu0 0.0
    %1310 = vmatpush1.xpose.msra.mxu0 0.0
    %1311 = vmatprep.subr.mxu0 0.0
    %1312 = vmatpush1.xpose.msra.mxu0 0.0
    %1313 = vmatprep.subr.mxu0 0.0
    %1314 = vmatpush1.xpose.msra.mxu0 0.0
    %1315 = vmatprep.subr.mxu0 0.0
    %1316 = vmatpush1.xpose.msra.mxu0 0.0
    %1317 = vmatprep.subr.mxu0 0.0
    %1318 = vmatpush1.xpose.msra.mxu0 %v1285
    %1319 = vmatprep.subr.mxu0 0.0
    %1320 = vmatpush2.xpose.msra.mxu0 0.0
    %1321 = vmatprep.subr.mxu0 0.0
    %1322 = vmatpush2.xpose.msra.mxu0 0.0
    %1323 = vmatprep.subr.mxu0 0.0
    %1324 = vmatpush2.xpose.msra.mxu0 0.0
    %1325 = vmatprep.subr.mxu0 0.0
    %1326 = vmatpush2.xpose.msra.mxu0 0.0
    %1327 = vmatprep.subr.mxu0 0.0
    %1328 = vmatpush2.xpose.msra.mxu0 0.0
    %1329 = vmatprep.subr.mxu0 0.0
    %1330 = vmatpush2.xpose.msra.mxu0 0.0
    %1331 = vmatprep.subr.mxu0 0.0
    %1332 = vmatpush2.xpose.msra.mxu0 0.0
    %1333 = vmatprep.subr.mxu0 0.0
    %1334 = vmatpush2.xpose.msra.mxu0 0.0
    %1335 = vmatprep.subr.mxu0 0.0
    %1336 = vmatpush2.xpose.msra.mxu0 0.0
    %1337 = vmatprep.subr.mxu0 0.0
    %1338 = vmatpush2.xpose.msra.mxu0 0.0
    %1339 = vmatprep.subr.mxu0 0.0
    %1340 = vmatpush2.xpose.msra.mxu0 0.0
    %1341 = vmatprep.subr.mxu0 0.0
    %1342 = vmatpush2.xpose.msra.mxu0 0.0
    %1343 = vmatprep.subr.mxu0 0.0
    %1344 = vmatpush2.xpose.msra.mxu0 0.0
    %1345 = vmatprep.subr.mxu0 0.0
    %1346 = vmatpush2.xpose.msra.mxu0 0.0
    %1347 = vmatprep.subr.mxu0 0.0
    %1348 = vmatpush2.xpose.msra.mxu0 0.0
    %1349 = vmatprep.subr.mxu0 0.0
    %1350 = vmatpush2.xpose.msra.mxu0 0.0
    %1351 = vmatprep.mubr.f32.mxu0 0.0
    %1352 = vmatmul.mubr.f32.gmra.mxu0 %v1277
    %v1353 = vpop.f32.mrf.mxu0
    %v1354 = vadd.f32 0.0, %v1353
    %v1355 = vpop.f32.mrf.mxu0
    %1356 = vmatprep.mubr.f32.mxu0 0.0
    %1357 = vmatmul.mubr.f32.gmra.mxu0 %v1279
    %v1358 = vpop.f32.mrf.mxu0
    %v1359 = vadd.f32 0.0, %v1358
    %v1360 = vpop.f32.mrf.mxu0
    %1361 = vmatprep.mubr.f32.mxu0 0.0
    %1362 = vmatmul.mubr.f32.gmra.mxu0 %v1281
    %v1363 = vpop.f32.mrf.mxu0
    %v1364 = vadd.f32 0.0, %v1363
    %v1365 = vpop.f32.mrf.mxu0
    %1366 = vmatprep.mubr.f32.mxu0 0.0
    %1367 = vmatmul.mubr.f32.gmra.mxu0 %v1283
    %v1368 = vpop.f32.mrf.mxu0
    %v1369 = vadd.f32 0.0, %v1368
    %v1370 = vpop.f32.mrf.mxu0
    %1371 = vdwg.mxu0
    %v1372 = vsel %vm870, %v1249, -inf
    %1373 = vmax.xlane.f32.xlu0 %v1372
    %v1374 = vpop.xlane.xlu0 %1373
    %v1375 = vsel %vm870, %v1254, -inf
    %1376 = vmax.xlane.f32.xlu0 %v1375
    %v1377 = vpop.xlane.xlu0 %1376
    %v1378 = vsel %vm870, %v1259, -inf
    %1379 = vmax.xlane.f32.xlu0 %v1378
    %v1380 = vpop.xlane.xlu0 %1379
    %v1381 = vsel %vm870, %v1264, -inf
    %1382 = vmax.xlane.f32.xlu0 %v1381
    %v1383 = vpop.xlane.xlu0 %1382
    %v1384 = vsel %vm870, %v1354, -inf
    %1385 = vmax.xlane.f32.xlu0 %v1384
    %v1386 = vpop.xlane.xlu0 %1385
    %v1387 = vsel %vm870, %v1359, -inf
    %1388 = vmax.xlane.f32.xlu0 %v1387
    %v1389 = vpop.xlane.xlu0 %1388
    %v1390 = vsel %vm870, %v1364, -inf
    %1391 = vmax.xlane.f32.xlu0 %v1390
    %v1392 = vpop.xlane.xlu0 %1391
    %v1393 = vsel %vm870, %v1369, -inf
    %1394 = vmax.xlane.f32.xlu0 %v1393
    %v1395 = vpop.xlane.xlu0 %1394
    %v1396 = vsub.f32 %v1249, %v1374
    %v1397 = vsub.f32 %v1254, %v1377
    %v1398 = vsub.f32 %v1259, %v1380
    %v1399 = vsub.f32 %v1264, %v1383
    %v1400 = vsub.f32 %v1354, %v1386
    %v1401 = vsub.f32 %v1359, %v1389
    %v1402 = vsub.f32 %v1364, %v1392
    %v1403 = vsub.f32 %v1369, %v1395
    %v1404 = vmul.f32 %v1396, 1.442695
    %v1405 = vpow.pop %v1404
    %v1406 = vmul.f32 %v1397, 1.442695
    %v1407 = vpow.pop %v1406
    %v1408 = vmul.f32 %v1398, 1.442695
    %v1409 = vpow.pop %v1408
    %v1410 = vmul.f32 %v1399, 1.442695
    %v1411 = vpow.pop %v1410
    %v1412 = vmul.f32 %v1400, 1.442695
    %v1413 = vpow.pop %v1412
    %v1414 = vmul.f32 %v1401, 1.442695
    %v1415 = vpow.pop %v1414
    %v1416 = vmul.f32 %v1402, 1.442695
    %v1417 = vpow.pop %v1416
    %v1418 = vmul.f32 %v1403, 1.442695
    %v1419 = vpow.pop %v1418
    %v1420 = vsel %vm870, %v1405, 0.0
    %1421 = vadd.xlane.f32.xlu0 %v1420
    %v1422 = vpop.xlane.xlu0 %1421
    %v1423 = vsel %vm870, %v1407, 0.0
    %1424 = vadd.xlane.f32.xlu0 %v1423
    %v1425 = vpop.xlane.xlu0 %1424
    %v1426 = vsel %vm870, %v1409, 0.0
    %1427 = vadd.xlane.f32.xlu0 %v1426
    %v1428 = vpop.xlane.xlu0 %1427
    %v1429 = vsel %vm870, %v1411, 0.0
    %1430 = vadd.xlane.f32.xlu0 %v1429
    %v1431 = vpop.xlane.xlu0 %1430
    %v1432 = vsel %vm870, %v1413, 0.0
    %1433 = vadd.xlane.f32.xlu0 %v1432
    %v1434 = vpop.xlane.xlu0 %1433
    %v1435 = vsel %vm870, %v1415, 0.0
    %1436 = vadd.xlane.f32.xlu0 %v1435
    %v1437 = vpop.xlane.xlu0 %1436
    %v1438 = vsel %vm870, %v1417, 0.0
    %1439 = vadd.xlane.f32.xlu0 %v1438
    %v1440 = vpop.xlane.xlu0 %1439
    %v1441 = vsel %vm870, %v1419, 0.0
    %1442 = vadd.xlane.f32.xlu0 %v1441
    %v1443 = vpop.xlane.xlu0 %1442
    %v1444 = vrcp.pop %v1422
    %v1445 = vrcp.pop %v1425
    %v1446 = vrcp.pop %v1428
    %v1447 = vrcp.pop %v1431
    %v1448 = vrcp.pop %v1434
    %v1449 = vrcp.pop %v1437
    %v1450 = vrcp.pop %v1440
    %v1451 = vrcp.pop %v1443
    %v1452 = vmul.f32 %v1405, %v1444
    %v1453 = vmul.f32 %v1407, %v1445
    %v1454 = vmul.f32 %v1409, %v1446
    %v1455 = vmul.f32 %v1411, %v1447
    %v1456 = vmul.f32 %v1413, %v1448
    %v1457 = vmul.f32 %v1415, %v1449
    %v1458 = vmul.f32 %v1417, %v1450
    %v1459 = vmul.f32 %v1419, %v1451
    %1460 = vrot.lane.b32.xlu0 %v654, 88
    %v1461 = vpop.permute.xlu0 %1460
    %v1463 = vsel %vm870, %v1452, 0
    %v1466 = vsel %vm870, %v1453, 0
    %v1469 = vsel %vm870, %v1454, 0
    %v1472 = vsel %vm870, %v1455, 0
    %v1474 = vsel %vm973, %v1461, 0
    %1476 = vmatprep.subr.mxu0 0.0
    %1477 = vmatpush1.msra.mxu0 0.0
    %1478 = vmatprep.subr.mxu0 0.0
    %1479 = vmatpush1.msra.mxu0 0.0
    %1480 = vmatprep.subr.mxu0 0.0
    %1481 = vmatpush1.msra.mxu0 0.0
    %1482 = vmatprep.subr.mxu0 0.0
    %1483 = vmatpush1.msra.mxu0 0.0
    %1484 = vmatprep.subr.mxu0 0.0
    %1485 = vmatpush1.msra.mxu0 0.0
    %1486 = vmatprep.subr.mxu0 0.0
    %1487 = vmatpush1.msra.mxu0 0.0
    %1488 = vmatprep.subr.mxu0 0.0
    %1489 = vmatpush1.msra.mxu0 0.0
    %1490 = vmatprep.subr.mxu0 0.0
    %1491 = vmatpush1.msra.mxu0 0.0
    %1492 = vmatprep.subr.mxu0 0.0
    %1493 = vmatpush1.msra.mxu0 0.0
    %1494 = vmatprep.subr.mxu0 0.0
    %1495 = vmatpush1.msra.mxu0 0.0
    %1496 = vmatprep.subr.mxu0 0.0
    %1497 = vmatpush1.msra.mxu0 0.0
    %1498 = vmatprep.subr.mxu0 0.0
    %1499 = vmatpush1.msra.mxu0 0.0
    %1500 = vmatprep.subr.mxu0 0.0
    %1501 = vmatpush1.msra.mxu0 0.0
    %1502 = vmatprep.subr.mxu0 0.0
    %1503 = vmatpush1.msra.mxu0 0.0
    %1504 = vmatprep.subr.mxu0 0.0
    %1505 = vmatpush1.msra.mxu0 0.0
    %1506 = vmatprep.subr.mxu0 0.0
    %1507 = vmatpush1.msra.mxu0 %v1474
    %1508 = vmatprep.subr.mxu0 0.0
    %1509 = vmatpush2.msra.mxu0 0.0
    %1510 = vmatprep.subr.mxu0 0.0
    %1511 = vmatpush2.msra.mxu0 0.0
    %1512 = vmatprep.subr.mxu0 0.0
    %1513 = vmatpush2.msra.mxu0 0.0
    %1514 = vmatprep.subr.mxu0 0.0
    %1515 = vmatpush2.msra.mxu0 0.0
    %1516 = vmatprep.subr.mxu0 0.0
    %1517 = vmatpush2.msra.mxu0 0.0
    %1518 = vmatprep.subr.mxu0 0.0
    %1519 = vmatpush2.msra.mxu0 0.0
    %1520 = vmatprep.subr.mxu0 0.0
    %1521 = vmatpush2.msra.mxu0 0.0
    %1522 = vmatprep.subr.mxu0 0.0
    %1523 = vmatpush2.msra.mxu0 0.0
    %1524 = vmatprep.subr.mxu0 0.0
    %1525 = vmatpush2.msra.mxu0 0.0
    %1526 = vmatprep.subr.mxu0 0.0
    %1527 = vmatpush2.msra.mxu0 0.0
    %1528 = vmatprep.subr.mxu0 0.0
    %1529 = vmatpush2.msra.mxu0 0.0
    %1530 = vmatprep.subr.mxu0 0.0
    %1531 = vmatpush2.msra.mxu0 0.0
    %1532 = vmatprep.subr.mxu0 0.0
    %1533 = vmatpush2.msra.mxu0 0.0
    %1534 = vmatprep.subr.mxu0 0.0
    %1535 = vmatpush2.msra.mxu0 0.0
    %1536 = vmatprep.subr.mxu0 0.0
    %1537 = vmatpush2.msra.mxu0 0.0
    %1538 = vmatprep.subr.mxu0 0.0
    %1539 = vmatpush2.msra.mxu0 0.0
    %1540 = vmatprep.mubr.f32.mxu0 0.0
    %1541 = vmatmul.mubr.f32.gmra.mxu0 %v1463
    %v1542 = vpop.f32.mrf.mxu0
    %v1543 = vadd.f32 0.0, %v1542
    %v1544 = vpop.f32.mrf.mxu0
    %1545 = vmatprep.mubr.f32.mxu0 0.0
    %1546 = vmatmul.mubr.f32.gmra.mxu0 %v1466
    %v1547 = vpop.f32.mrf.mxu0
    %v1548 = vadd.f32 0.0, %v1547
    %v1549 = vpop.f32.mrf.mxu0
    %1550 = vmatprep.mubr.f32.mxu0 0.0
    %1551 = vmatmul.mubr.f32.gmra.mxu0 %v1469
    %v1552 = vpop.f32.mrf.mxu0
    %v1553 = vadd.f32 0.0, %v1552
    %v1554 = vpop.f32.mrf.mxu0
    %1555 = vmatprep.mubr.f32.mxu0 0.0
    %1556 = vmatmul.mubr.f32.gmra.mxu0 %v1472
    %v1557 = vpop.f32.mrf.mxu0
    %v1558 = vadd.f32 0.0, %v1557
    %v1559 = vpop.f32.mrf.mxu0
    %1560 = vdwg.mxu0
    %1561 = vrot.lane.b32.xlu0 %v770, 88
    %v1562 = vpop.permute.xlu0 %1561
    %v1564 = vsel %vm870, %v1456, 0
    %v1567 = vsel %vm870, %v1457, 0
    %v1570 = vsel %vm870, %v1458, 0
    %v1573 = vsel %vm870, %v1459, 0
    %v1575 = vsel %vm973, %v1562, 0
    %1577 = vmatprep.subr.mxu0 0.0
    %1578 = vmatpush1.msra.mxu0 0.0
    %1579 = vmatprep.subr.mxu0 0.0
    %1580 = vmatpush1.msra.mxu0 0.0
    %1581 = vmatprep.subr.mxu0 0.0
    %1582 = vmatpush1.msra.mxu0 0.0
    %1583 = vmatprep.subr.mxu0 0.0
    %1584 = vmatpush1.msra.mxu0 0.0
    %1585 = vmatprep.subr.mxu0 0.0
    %1586 = vmatpush1.msra.mxu0 0.0
    %1587 = vmatprep.subr.mxu0 0.0
    %1588 = vmatpush1.msra.mxu0 0.0
    %1589 = vmatprep.subr.mxu0 0.0
    %1590 = vmatpush1.msra.mxu0 0.0
    %1591 = vmatprep.subr.mxu0 0.0
    %1592 = vmatpush1.msra.mxu0 0.0
    %1593 = vmatprep.subr.mxu0 0.0
    %1594 = vmatpush1.msra.mxu0 0.0
    %1595 = vmatprep.subr.mxu0 0.0
    %1596 = vmatpush1.msra.mxu0 0.0
    %1597 = vmatprep.subr.mxu0 0.0
    %1598 = vmatpush1.msra.mxu0 0.0
    %1599 = vmatprep.subr.mxu0 0.0
    %1600 = vmatpush1.msra.mxu0 0.0
    %1601 = vmatprep.subr.mxu0 0.0
    %1602 = vmatpush1.msra.mxu0 0.0
    %1603 = vmatprep.subr.mxu0 0.0
    %1604 = vmatpush1.msra.mxu0 0.0
    %1605 = vmatprep.subr.mxu0 0.0
    %1606 = vmatpush1.msra.mxu0 0.0
    %1607 = vmatprep.subr.mxu0 0.0
    %1608 = vmatpush1.msra.mxu0 %v1575
    %1609 = vmatprep.subr.mxu0 0.0
    %1610 = vmatpush2.msra.mxu0 0.0
    %1611 = vmatprep.subr.mxu0 0.0
    %1612 = vmatpush2.msra.mxu0 0.0
    %1613 = vmatprep.subr.mxu0 0.0
    %1614 = vmatpush2.msra.mxu0 0.0
    %1615 = vmatprep.subr.mxu0 0.0
    %1616 = vmatpush2.msra.mxu0 0.0
    %1617 = vmatprep.subr.mxu0 0.0
    %1618 = vmatpush2.msra.mxu0 0.0
    %1619 = vmatprep.subr.mxu0 0.0
    %1620 = vmatpush2.msra.mxu0 0.0
    %1621 = vmatprep.subr.mxu0 0.0
    %1622 = vmatpush2.msra.mxu0 0.0
    %1623 = vmatprep.subr.mxu0 0.0
    %1624 = vmatpush2.msra.mxu0 0.0
    %1625 = vmatprep.subr.mxu0 0.0
    %1626 = vmatpush2.msra.mxu0 0.0
    %1627 = vmatprep.subr.mxu0 0.0
    %1628 = vmatpush2.msra.mxu0 0.0
    %1629 = vmatprep.subr.mxu0 0.0
    %1630 = vmatpush2.msra.mxu0 0.0
    %1631 = vmatprep.subr.mxu0 0.0
    %1632 = vmatpush2.msra.mxu0 0.0
    %1633 = vmatprep.subr.mxu0 0.0
    %1634 = vmatpush2.msra.mxu0 0.0
    %1635 = vmatprep.subr.mxu0 0.0
    %1636 = vmatpush2.msra.mxu0 0.0
    %1637 = vmatprep.subr.mxu0 0.0
    %1638 = vmatpush2.msra.mxu0 0.0
    %1639 = vmatprep.subr.mxu0 0.0
    %1640 = vmatpush2.msra.mxu0 0.0
    %1641 = vmatprep.mubr.f32.mxu0 0.0
    %1642 = vmatmul.mubr.f32.gmra.mxu0 %v1564
    %v1643 = vpop.f32.mrf.mxu0
    %v1644 = vadd.f32 0.0, %v1643
    %v1645 = vpop.f32.mrf.mxu0
    %1646 = vmatprep.mubr.f32.mxu0 0.0
    %1647 = vmatmul.mubr.f32.gmra.mxu0 %v1567
    %v1648 = vpop.f32.mrf.mxu0
    %v1649 = vadd.f32 0.0, %v1648
    %v1650 = vpop.f32.mrf.mxu0
    %1651 = vmatprep.mubr.f32.mxu0 0.0
    %1652 = vmatmul.mubr.f32.gmra.mxu0 %v1570
    %v1653 = vpop.f32.mrf.mxu0
    %v1654 = vadd.f32 0.0, %v1653
    %v1655 = vpop.f32.mrf.mxu0
    %1656 = vmatprep.mubr.f32.mxu0 0.0
    %1657 = vmatmul.mubr.f32.gmra.mxu0 %v1573
    %v1658 = vpop.f32.mrf.mxu0
    %v1659 = vadd.f32 0.0, %v1658
    %v1660 = vpop.f32.mrf.mxu0
    %1661 = vdwg.mxu0
    %1662 = vrot.lane.b32.xlu0 %v412, 112
    %v1663 = vpop.permute.xlu0 %1662
    %1664 = vrot.lane.b32.xlu0 %v413, 112
    %v1665 = vpop.permute.xlu0 %1664
    %1666 = vrot.lane.b32.xlu0 %v414, 112
    %v1667 = vpop.permute.xlu0 %1666
    %1668 = vrot.lane.b32.xlu0 %v415, 112
    %v1669 = vpop.permute.xlu0 %1668
    %1670 = vrot.lane.b32.xlu0 %v654, 112
    %v1671 = vpop.permute.xlu0 %1670
    %v1672 = vsel %vm655, %v1663, 0
    %v1674 = vsel %vm655, %v1665, 0
    %v1676 = vsel %vm655, %v1667, 0
    %v1678 = vsel %vm655, %v1669, 0
    %v1680 = vsel %vm655, %v1671, 0
    %1682 = vmatprep.subr.mxu0 0.0
    %1683 = vmatpush1.xpose.msra.mxu0 0.0
    %1684 = vmatprep.subr.mxu0 0.0
    %1685 = vmatpush1.xpose.msra.mxu0 0.0
    %1686 = vmatprep.subr.mxu0 0.0
    %1687 = vmatpush1.xpose.msra.mxu0 0.0
    %1688 = vmatprep.subr.mxu0 0.0
    %1689 = vmatpush1.xpose.msra.mxu0 0.0
    %1690 = vmatprep.subr.mxu0 0.0
    %1691 = vmatpush1.xpose.msra.mxu0 0.0
    %1692 = vmatprep.subr.mxu0 0.0
    %1693 = vmatpush1.xpose.msra.mxu0 0.0
    %1694 = vmatprep.subr.mxu0 0.0
    %1695 = vmatpush1.xpose.msra.mxu0 0.0
    %1696 = vmatprep.subr.mxu0 0.0
    %1697 = vmatpush1.xpose.msra.mxu0 0.0
    %1698 = vmatprep.subr.mxu0 0.0
    %1699 = vmatpush1.xpose.msra.mxu0 0.0
    %1700 = vmatprep.subr.mxu0 0.0
    %1701 = vmatpush1.xpose.msra.mxu0 0.0
    %1702 = vmatprep.subr.mxu0 0.0
    %1703 = vmatpush1.xpose.msra.mxu0 0.0
    %1704 = vmatprep.subr.mxu0 0.0
    %1705 = vmatpush1.xpose.msra.mxu0 0.0
    %1706 = vmatprep.subr.mxu0 0.0
    %1707 = vmatpush1.xpose.msra.mxu0 0.0
    %1708 = vmatprep.subr.mxu0 0.0
    %1709 = vmatpush1.xpose.msra.mxu0 0.0
    %1710 = vmatprep.subr.mxu0 0.0
    %1711 = vmatpush1.xpose.msra.mxu0 0.0
    %1712 = vmatprep.subr.mxu0 0.0
    %1713 = vmatpush1.xpose.msra.mxu0 %v1680
    %1714 = vmatprep.subr.mxu0 0.0
    %1715 = vmatpush2.xpose.msra.mxu0 0.0
    %1716 = vmatprep.subr.mxu0 0.0
    %1717 = vmatpush2.xpose.msra.mxu0 0.0
    %1718 = vmatprep.subr.mxu0 0.0
    %1719 = vmatpush2.xpose.msra.mxu0 0.0
    %1720 = vmatprep.subr.mxu0 0.0
    %1721 = vmatpush2.xpose.msra.mxu0 0.0
    %1722 = vmatprep.subr.mxu0 0.0
    %1723 = vmatpush2.xpose.msra.mxu0 0.0
    %1724 = vmatprep.subr.mxu0 0.0
    %1725 = vmatpush2.xpose.msra.mxu0 0.0
    %1726 = vmatprep.subr.mxu0 0.0
    %1727 = vmatpush2.xpose.msra.mxu0 0.0
    %1728 = vmatprep.subr.mxu0 0.0
    %1729 = vmatpush2.xpose.msra.mxu0 0.0
    %1730 = vmatprep.subr.mxu0 0.0
    %1731 = vmatpush2.xpose.msra.mxu0 0.0
    %1732 = vmatprep.subr.mxu0 0.0
    %1733 = vmatpush2.xpose.msra.mxu0 0.0
    %1734 = vmatprep.subr.mxu0 0.0
    %1735 = vmatpush2.xpose.msra.mxu0 0.0
    %1736 = vmatprep.subr.mxu0 0.0
    %1737 = vmatpush2.xpose.msra.mxu0 0.0
    %1738 = vmatprep.subr.mxu0 0.0
    %1739 = vmatpush2.xpose.msra.mxu0 0.0
    %1740 = vmatprep.subr.mxu0 0.0
    %1741 = vmatpush2.xpose.msra.mxu0 0.0
    %1742 = vmatprep.subr.mxu0 0.0
    %1743 = vmatpush2.xpose.msra.mxu0 0.0
    %1744 = vmatprep.subr.mxu0 0.0
    %1745 = vmatpush2.xpose.msra.mxu0 0.0
    %1746 = vmatprep.mubr.f32.mxu0 0.0
    %1747 = vmatmul.mubr.f32.gmra.mxu0 %v1672
    %v1748 = vpop.f32.mrf.mxu0
    %v1749 = vadd.f32 0.0, %v1748
    %v1750 = vpop.f32.mrf.mxu0
    %1751 = vmatprep.mubr.f32.mxu0 0.0
    %1752 = vmatmul.mubr.f32.gmra.mxu0 %v1674
    %v1753 = vpop.f32.mrf.mxu0
    %v1754 = vadd.f32 0.0, %v1753
    %v1755 = vpop.f32.mrf.mxu0
    %1756 = vmatprep.mubr.f32.mxu0 0.0
    %1757 = vmatmul.mubr.f32.gmra.mxu0 %v1676
    %v1758 = vpop.f32.mrf.mxu0
    %v1759 = vadd.f32 0.0, %v1758
    %v1760 = vpop.f32.mrf.mxu0
    %1761 = vmatprep.mubr.f32.mxu0 0.0
    %1762 = vmatmul.mubr.f32.gmra.mxu0 %v1678
    %v1763 = vpop.f32.mrf.mxu0
    %v1764 = vadd.f32 0.0, %v1763
    %v1765 = vpop.f32.mrf.mxu0
    %1766 = vdwg.mxu0
    %1767 = vrot.lane.b32.xlu0 %v416, 112
    %v1768 = vpop.permute.xlu0 %1767
    %1769 = vrot.lane.b32.xlu0 %v417, 112
    %v1770 = vpop.permute.xlu0 %1769
    %1771 = vrot.lane.b32.xlu0 %v418, 112
    %v1772 = vpop.permute.xlu0 %1771
    %1773 = vrot.lane.b32.xlu0 %v419, 112
    %v1774 = vpop.permute.xlu0 %1773
    %1775 = vrot.lane.b32.xlu0 %v770, 112
    %v1776 = vpop.permute.xlu0 %1775
    %v1777 = vsel %vm655, %v1768, 0
    %v1779 = vsel %vm655, %v1770, 0
    %v1781 = vsel %vm655, %v1772, 0
    %v1783 = vsel %vm655, %v1774, 0
    %v1785 = vsel %vm655, %v1776, 0
    %1787 = vmatprep.subr.mxu0 0.0
    %1788 = vmatpush1.xpose.msra.mxu0 0.0
    %1789 = vmatprep.subr.mxu0 0.0
    %1790 = vmatpush1.xpose.msra.mxu0 0.0
    %1791 = vmatprep.subr.mxu0 0.0
    %1792 = vmatpush1.xpose.msra.mxu0 0.0
    %1793 = vmatprep.subr.mxu0 0.0
    %1794 = vmatpush1.xpose.msra.mxu0 0.0
    %1795 = vmatprep.subr.mxu0 0.0
    %1796 = vmatpush1.xpose.msra.mxu0 0.0
    %1797 = vmatprep.subr.mxu0 0.0
    %1798 = vmatpush1.xpose.msra.mxu0 0.0
    %1799 = vmatprep.subr.mxu0 0.0
    %1800 = vmatpush1.xpose.msra.mxu0 0.0
    %1801 = vmatprep.subr.mxu0 0.0
    %1802 = vmatpush1.xpose.msra.mxu0 0.0
    %1803 = vmatprep.subr.mxu0 0.0
    %1804 = vmatpush1.xpose.msra.mxu0 0.0
    %1805 = vmatprep.subr.mxu0 0.0
    %1806 = vmatpush1.xpose.msra.mxu0 0.0
    %1807 = vmatprep.subr.mxu0 0.0
    %1808 = vmatpush1.xpose.msra.mxu0 0.0
    %1809 = vmatprep.subr.mxu0 0.0
    %1810 = vmatpush1.xpose.msra.mxu0 0.0
    %1811 = vmatprep.subr.mxu0 0.0
    %1812 = vmatpush1.xpose.msra.mxu0 0.0
    %1813 = vmatprep.subr.mxu0 0.0
    %1814 = vmatpush1.xpose.msra.mxu0 0.0
    %1815 = vmatprep.subr.mxu0 0.0
    %1816 = vmatpush1.xpose.msra.mxu0 0.0
    %1817 = vmatprep.subr.mxu0 0.0
    %1818 = vmatpush1.xpose.msra.mxu0 %v1785
    %1819 = vmatprep.subr.mxu0 0.0
    %1820 = vmatpush2.xpose.msra.mxu0 0.0
    %1821 = vmatprep.subr.mxu0 0.0
    %1822 = vmatpush2.xpose.msra.mxu0 0.0
    %1823 = vmatprep.subr.mxu0 0.0
    %1824 = vmatpush2.xpose.msra.mxu0 0.0
    %1825 = vmatprep.subr.mxu0 0.0
    %1826 = vmatpush2.xpose.msra.mxu0 0.0
    %1827 = vmatprep.subr.mxu0 0.0
    %1828 = vmatpush2.xpose.msra.mxu0 0.0
    %1829 = vmatprep.subr.mxu0 0.0
    %1830 = vmatpush2.xpose.msra.mxu0 0.0
    %1831 = vmatprep.subr.mxu0 0.0
    %1832 = vmatpush2.xpose.msra.mxu0 0.0
    %1833 = vmatprep.subr.mxu0 0.0
    %1834 = vmatpush2.xpose.msra.mxu0 0.0
    %1835 = vmatprep.subr.mxu0 0.0
    %1836 = vmatpush2.xpose.msra.mxu0 0.0
    %1837 = vmatprep.subr.mxu0 0.0
    %1838 = vmatpush2.xpose.msra.mxu0 0.0
    %1839 = vmatprep.subr.mxu0 0.0
    %1840 = vmatpush2.xpose.msra.mxu0 0.0
    %1841 = vmatprep.subr.mxu0 0.0
    %1842 = vmatpush2.xpose.msra.mxu0 0.0
    %1843 = vmatprep.subr.mxu0 0.0
    %1844 = vmatpush2.xpose.msra.mxu0 0.0
    %1845 = vmatprep.subr.mxu0 0.0
    %1846 = vmatpush2.xpose.msra.mxu0 0.0
    %1847 = vmatprep.subr.mxu0 0.0
    %1848 = vmatpush2.xpose.msra.mxu0 0.0
    %1849 = vmatprep.subr.mxu0 0.0
    %1850 = vmatpush2.xpose.msra.mxu0 0.0
    %1851 = vmatprep.mubr.f32.mxu0 0.0
    %1852 = vmatmul.mubr.f32.gmra.mxu0 %v1777
    %v1853 = vpop.f32.mrf.mxu0
    %v1854 = vadd.f32 0.0, %v1853
    %v1855 = vpop.f32.mrf.mxu0
    %1856 = vmatprep.mubr.f32.mxu0 0.0
    %1857 = vmatmul.mubr.f32.gmra.mxu0 %v1779
    %v1858 = vpop.f32.mrf.mxu0
    %v1859 = vadd.f32 0.0, %v1858
    %v1860 = vpop.f32.mrf.mxu0
    %1861 = vmatprep.mubr.f32.mxu0 0.0
    %1862 = vmatmul.mubr.f32.gmra.mxu0 %v1781
    %v1863 = vpop.f32.mrf.mxu0
    %v1864 = vadd.f32 0.0, %v1863
    %v1865 = vpop.f32.mrf.mxu0
    %1866 = vmatprep.mubr.f32.mxu0 0.0
    %1867 = vmatmul.mubr.f32.gmra.mxu0 %v1783
    %v1868 = vpop.f32.mrf.mxu0
    %v1869 = vadd.f32 0.0, %v1868
    %v1870 = vpop.f32.mrf.mxu0
    %1871 = vdwg.mxu0
    %v1872 = vsel %vm870, %v1749, -inf
    %1873 = vmax.xlane.f32.xlu0 %v1872
    %v1874 = vpop.xlane.xlu0 %1873
    %v1875 = vsel %vm870, %v1754, -inf
    %1876 = vmax.xlane.f32.xlu0 %v1875
    %v1877 = vpop.xlane.xlu0 %1876
    %v1878 = vsel %vm870, %v1759, -inf
    %1879 = vmax.xlane.f32.xlu0 %v1878
    %v1880 = vpop.xlane.xlu0 %1879
    %v1881 = vsel %vm870, %v1764, -inf
    %1882 = vmax.xlane.f32.xlu0 %v1881
    %v1883 = vpop.xlane.xlu0 %1882
    %v1884 = vsel %vm870, %v1854, -inf
    %1885 = vmax.xlane.f32.xlu0 %v1884
    %v1886 = vpop.xlane.xlu0 %1885
    %v1887 = vsel %vm870, %v1859, -inf
    %1888 = vmax.xlane.f32.xlu0 %v1887
    %v1889 = vpop.xlane.xlu0 %1888
    %v1890 = vsel %vm870, %v1864, -inf
    %1891 = vmax.xlane.f32.xlu0 %v1890
    %v1892 = vpop.xlane.xlu0 %1891
    %v1893 = vsel %vm870, %v1869, -inf
    %1894 = vmax.xlane.f32.xlu0 %v1893
    %v1895 = vpop.xlane.xlu0 %1894
    %v1896 = vsub.f32 %v1749, %v1874
    %v1897 = vsub.f32 %v1754, %v1877
    %v1898 = vsub.f32 %v1759, %v1880
    %v1899 = vsub.f32 %v1764, %v1883
    %v1900 = vsub.f32 %v1854, %v1886
    %v1901 = vsub.f32 %v1859, %v1889
    %v1902 = vsub.f32 %v1864, %v1892
    %v1903 = vsub.f32 %v1869, %v1895
    %v1904 = vmul.f32 %v1896, 1.442695
    %v1905 = vpow.pop %v1904
    %v1906 = vmul.f32 %v1897, 1.442695
    %v1907 = vpow.pop %v1906
    %v1908 = vmul.f32 %v1898, 1.442695
    %v1909 = vpow.pop %v1908
    %v1910 = vmul.f32 %v1899, 1.442695
    %v1911 = vpow.pop %v1910
    %v1912 = vmul.f32 %v1900, 1.442695
    %v1913 = vpow.pop %v1912
    %v1914 = vmul.f32 %v1901, 1.442695
    %v1915 = vpow.pop %v1914
    %v1916 = vmul.f32 %v1902, 1.442695
    %v1917 = vpow.pop %v1916
    %v1918 = vmul.f32 %v1903, 1.442695
    %v1919 = vpow.pop %v1918
    %v1920 = vsel %vm870, %v1905, 0.0
    %1921 = vadd.xlane.f32.xlu0 %v1920
    %v1922 = vpop.xlane.xlu0 %1921
    %v1923 = vsel %vm870, %v1907, 0.0
    %1924 = vadd.xlane.f32.xlu0 %v1923
    %v1925 = vpop.xlane.xlu0 %1924
    %v1926 = vsel %vm870, %v1909, 0.0
    %1927 = vadd.xlane.f32.xlu0 %v1926
    %v1928 = vpop.xlane.xlu0 %1927
    %v1929 = vsel %vm870, %v1911, 0.0
    %1930 = vadd.xlane.f32.xlu0 %v1929
    %v1931 = vpop.xlane.xlu0 %1930
    %v1932 = vsel %vm870, %v1913, 0.0
    %1933 = vadd.xlane.f32.xlu0 %v1932
    %v1934 = vpop.xlane.xlu0 %1933
    %v1935 = vsel %vm870, %v1915, 0.0
    %1936 = vadd.xlane.f32.xlu0 %v1935
    %v1937 = vpop.xlane.xlu0 %1936
    %v1938 = vsel %vm870, %v1917, 0.0
    %1939 = vadd.xlane.f32.xlu0 %v1938
    %v1940 = vpop.xlane.xlu0 %1939
    %v1941 = vsel %vm870, %v1919, 0.0
    %1942 = vadd.xlane.f32.xlu0 %v1941
    %v1943 = vpop.xlane.xlu0 %1942
    %v1944 = vrcp.pop %v1922
    %v1945 = vrcp.pop %v1925
    %v1946 = vrcp.pop %v1928
    %v1947 = vrcp.pop %v1931
    %v1948 = vrcp.pop %v1934
    %v1949 = vrcp.pop %v1937
    %v1950 = vrcp.pop %v1940
    %v1951 = vrcp.pop %v1943
    %v1952 = vmul.f32 %v1905, %v1944
    %v1953 = vmul.f32 %v1907, %v1945
    %v1954 = vmul.f32 %v1909, %v1946
    %v1955 = vmul.f32 %v1911, %v1947
    %v1956 = vmul.f32 %v1913, %v1948
    %v1957 = vmul.f32 %v1915, %v1949
    %v1958 = vmul.f32 %v1917, %v1950
    %v1959 = vmul.f32 %v1919, %v1951
    %1960 = vrot.lane.b32.xlu0 %v654, 80
    %v1961 = vpop.permute.xlu0 %1960
    %v1963 = vsel %vm870, %v1952, 0
    %v1966 = vsel %vm870, %v1953, 0
    %v1969 = vsel %vm870, %v1954, 0
    %v1972 = vsel %vm870, %v1955, 0
    %v1974 = vsel %vm973, %v1961, 0
    %1976 = vmatprep.subr.mxu0 0.0
    %1977 = vmatpush1.msra.mxu0 0.0
    %1978 = vmatprep.subr.mxu0 0.0
    %1979 = vmatpush1.msra.mxu0 0.0
    %1980 = vmatprep.subr.mxu0 0.0
    %1981 = vmatpush1.msra.mxu0 0.0
    %1982 = vmatprep.subr.mxu0 0.0
    %1983 = vmatpush1.msra.mxu0 0.0
    %1984 = vmatprep.subr.mxu0 0.0
    %1985 = vmatpush1.msra.mxu0 0.0
    %1986 = vmatprep.subr.mxu0 0.0
    %1987 = vmatpush1.msra.mxu0 0.0
    %1988 = vmatprep.subr.mxu0 0.0
    %1989 = vmatpush1.msra.mxu0 0.0
    %1990 = vmatprep.subr.mxu0 0.0
    %1991 = vmatpush1.msra.mxu0 0.0
    %1992 = vmatprep.subr.mxu0 0.0
    %1993 = vmatpush1.msra.mxu0 0.0
    %1994 = vmatprep.subr.mxu0 0.0
    %1995 = vmatpush1.msra.mxu0 0.0
    %1996 = vmatprep.subr.mxu0 0.0
    %1997 = vmatpush1.msra.mxu0 0.0
    %1998 = vmatprep.subr.mxu0 0.0
    %1999 = vmatpush1.msra.mxu0 0.0
    %2000 = vmatprep.subr.mxu0 0.0
    %2001 = vmatpush1.msra.mxu0 0.0
    %2002 = vmatprep.subr.mxu0 0.0
    %2003 = vmatpush1.msra.mxu0 0.0
    %2004 = vmatprep.subr.mxu0 0.0
    %2005 = vmatpush1.msra.mxu0 0.0
    %2006 = vmatprep.subr.mxu0 0.0
    %2007 = vmatpush1.msra.mxu0 %v1974
    %2008 = vmatprep.subr.mxu0 0.0
    %2009 = vmatpush2.msra.mxu0 0.0
    %2010 = vmatprep.subr.mxu0 0.0
    %2011 = vmatpush2.msra.mxu0 0.0
    %2012 = vmatprep.subr.mxu0 0.0
    %2013 = vmatpush2.msra.mxu0 0.0
    %2014 = vmatprep.subr.mxu0 0.0
    %2015 = vmatpush2.msra.mxu0 0.0
    %2016 = vmatprep.subr.mxu0 0.0
    %2017 = vmatpush2.msra.mxu0 0.0
    %2018 = vmatprep.subr.mxu0 0.0
    %2019 = vmatpush2.msra.mxu0 0.0
    %2020 = vmatprep.subr.mxu0 0.0
    %2021 = vmatpush2.msra.mxu0 0.0
    %2022 = vmatprep.subr.mxu0 0.0
    %2023 = vmatpush2.msra.mxu0 0.0
    %2024 = vmatprep.subr.mxu0 0.0
    %2025 = vmatpush2.msra.mxu0 0.0
    %2026 = vmatprep.subr.mxu0 0.0
    %2027 = vmatpush2.msra.mxu0 0.0
    %2028 = vmatprep.subr.mxu0 0.0
    %2029 = vmatpush2.msra.mxu0 0.0
    %2030 = vmatprep.subr.mxu0 0.0
    %2031 = vmatpush2.msra.mxu0 0.0
    %2032 = vmatprep.subr.mxu0 0.0
    %2033 = vmatpush2.msra.mxu0 0.0
    %2034 = vmatprep.subr.mxu0 0.0
    %2035 = vmatpush2.msra.mxu0 0.0
    %2036 = vmatprep.subr.mxu0 0.0
    %2037 = vmatpush2.msra.mxu0 0.0
    %2038 = vmatprep.subr.mxu0 0.0
    %2039 = vmatpush2.msra.mxu0 0.0
    %2040 = vmatprep.mubr.f32.mxu0 0.0
    %2041 = vmatmul.mubr.f32.gmra.mxu0 %v1963
    %v2042 = vpop.f32.mrf.mxu0
    %v2043 = vadd.f32 0.0, %v2042
    %v2044 = vpop.f32.mrf.mxu0
    %2045 = vmatprep.mubr.f32.mxu0 0.0
    %2046 = vmatmul.mubr.f32.gmra.mxu0 %v1966
    %v2047 = vpop.f32.mrf.mxu0
    %v2048 = vadd.f32 0.0, %v2047
    %v2049 = vpop.f32.mrf.mxu0
    %2050 = vmatprep.mubr.f32.mxu0 0.0
    %2051 = vmatmul.mubr.f32.gmra.mxu0 %v1969
    %v2052 = vpop.f32.mrf.mxu0
    %v2053 = vadd.f32 0.0, %v2052
    %v2054 = vpop.f32.mrf.mxu0
    %2055 = vmatprep.mubr.f32.mxu0 0.0
    %2056 = vmatmul.mubr.f32.gmra.mxu0 %v1972
    %v2057 = vpop.f32.mrf.mxu0
    %v2058 = vadd.f32 0.0, %v2057
    %v2059 = vpop.f32.mrf.mxu0
    %2060 = vdwg.mxu0
    %2061 = vrot.lane.b32.xlu0 %v770, 80
    %v2062 = vpop.permute.xlu0 %2061
    %v2064 = vsel %vm870, %v1956, 0
    %v2067 = vsel %vm870, %v1957, 0
    %v2070 = vsel %vm870, %v1958, 0
    %v2073 = vsel %vm870, %v1959, 0
    %v2075 = vsel %vm973, %v2062, 0
    %2077 = vmatprep.subr.mxu0 0.0
    %2078 = vmatpush1.msra.mxu0 0.0
    %2079 = vmatprep.subr.mxu0 0.0
    %2080 = vmatpush1.msra.mxu0 0.0
    %2081 = vmatprep.subr.mxu0 0.0
    %2082 = vmatpush1.msra.mxu0 0.0
    %2083 = vmatprep.subr.mxu0 0.0
    %2084 = vmatpush1.msra.mxu0 0.0
    %2085 = vmatprep.subr.mxu0 0.0
    %2086 = vmatpush1.msra.mxu0 0.0
    %2087 = vmatprep.subr.mxu0 0.0
    %2088 = vmatpush1.msra.mxu0 0.0
    %2089 = vmatprep.subr.mxu0 0.0
    %2090 = vmatpush1.msra.mxu0 0.0
    %2091 = vmatprep.subr.mxu0 0.0
    %2092 = vmatpush1.msra.mxu0 0.0
    %2093 = vmatprep.subr.mxu0 0.0
    %2094 = vmatpush1.msra.mxu0 0.0
    %2095 = vmatprep.subr.mxu0 0.0
    %2096 = vmatpush1.msra.mxu0 0.0
    %2097 = vmatprep.subr.mxu0 0.0
    %2098 = vmatpush1.msra.mxu0 0.0
    %2099 = vmatprep.subr.mxu0 0.0
    %2100 = vmatpush1.msra.mxu0 0.0
    %2101 = vmatprep.subr.mxu0 0.0
    %2102 = vmatpush1.msra.mxu0 0.0
    %2103 = vmatprep.subr.mxu0 0.0
    %2104 = vmatpush1.msra.mxu0 0.0
    %2105 = vmatprep.subr.mxu0 0.0
    %2106 = vmatpush1.msra.mxu0 0.0
    %2107 = vmatprep.subr.mxu0 0.0
    %2108 = vmatpush1.msra.mxu0 %v2075
    %2109 = vmatprep.subr.mxu0 0.0
    %2110 = vmatpush2.msra.mxu0 0.0
    %2111 = vmatprep.subr.mxu0 0.0
    %2112 = vmatpush2.msra.mxu0 0.0
    %2113 = vmatprep.subr.mxu0 0.0
    %2114 = vmatpush2.msra.mxu0 0.0
    %2115 = vmatprep.subr.mxu0 0.0
    %2116 = vmatpush2.msra.mxu0 0.0
    %2117 = vmatprep.subr.mxu0 0.0
    %2118 = vmatpush2.msra.mxu0 0.0
    %2119 = vmatprep.subr.mxu0 0.0
    %2120 = vmatpush2.msra.mxu0 0.0
    %2121 = vmatprep.subr.mxu0 0.0
    %2122 = vmatpush2.msra.mxu0 0.0
    %2123 = vmatprep.subr.mxu0 0.0
    %2124 = vmatpush2.msra.mxu0 0.0
    %2125 = vmatprep.subr.mxu0 0.0
    %2126 = vmatpush2.msra.mxu0 0.0
    %2127 = vmatprep.subr.mxu0 0.0
    %2128 = vmatpush2.msra.mxu0 0.0
    %2129 = vmatprep.subr.mxu0 0.0
    %2130 = vmatpush2.msra.mxu0 0.0
    %2131 = vmatprep.subr.mxu0 0.0
    %2132 = vmatpush2.msra.mxu0 0.0
    %2133 = vmatprep.subr.mxu0 0.0
    %2134 = vmatpush2.msra.mxu0 0.0
    %2135 = vmatprep.subr.mxu0 0.0
    %2136 = vmatpush2.msra.mxu0 0.0
    %2137 = vmatprep.subr.mxu0 0.0
    %2138 = vmatpush2.msra.mxu0 0.0
    %2139 = vmatprep.subr.mxu0 0.0
    %2140 = vmatpush2.msra.mxu0 0.0
    %2141 = vmatprep.mubr.f32.mxu0 0.0
    %2142 = vmatmul.mubr.f32.gmra.mxu0 %v2064
    %v2143 = vpop.f32.mrf.mxu0
    %v2144 = vadd.f32 0.0, %v2143
    %v2145 = vpop.f32.mrf.mxu0
    %2146 = vmatprep.mubr.f32.mxu0 0.0
    %2147 = vmatmul.mubr.f32.gmra.mxu0 %v2067
    %v2148 = vpop.f32.mrf.mxu0
    %v2149 = vadd.f32 0.0, %v2148
    %v2150 = vpop.f32.mrf.mxu0
    %2151 = vmatprep.mubr.f32.mxu0 0.0
    %2152 = vmatmul.mubr.f32.gmra.mxu0 %v2070
    %v2153 = vpop.f32.mrf.mxu0
    %v2154 = vadd.f32 0.0, %v2153
    %v2155 = vpop.f32.mrf.mxu0
    %2156 = vmatprep.mubr.f32.mxu0 0.0
    %2157 = vmatmul.mubr.f32.gmra.mxu0 %v2073
    %v2158 = vpop.f32.mrf.mxu0
    %v2159 = vadd.f32 0.0, %v2158
    %v2160 = vpop.f32.mrf.mxu0
    %2161 = vdwg.mxu0
    %2162 = vrot.lane.b32.xlu0 %v412, 104
    %v2163 = vpop.permute.xlu0 %2162
    %2164 = vrot.lane.b32.xlu0 %v413, 104
    %v2165 = vpop.permute.xlu0 %2164
    %2166 = vrot.lane.b32.xlu0 %v414, 104
    %v2167 = vpop.permute.xlu0 %2166
    %2168 = vrot.lane.b32.xlu0 %v415, 104
    %v2169 = vpop.permute.xlu0 %2168
    %2170 = vrot.lane.b32.xlu0 %v654, 104
    %v2171 = vpop.permute.xlu0 %2170
    %v2172 = vsel %vm655, %v2163, 0
    %v2174 = vsel %vm655, %v2165, 0
    %v2176 = vsel %vm655, %v2167, 0
    %v2178 = vsel %vm655, %v2169, 0
    %v2180 = vsel %vm655, %v2171, 0
    %2182 = vmatprep.subr.mxu0 0.0
    %2183 = vmatpush1.xpose.msra.mxu0 0.0
    %2184 = vmatprep.subr.mxu0 0.0
    %2185 = vmatpush1.xpose.msra.mxu0 0.0
    %2186 = vmatprep.subr.mxu0 0.0
    %2187 = vmatpush1.xpose.msra.mxu0 0.0
    %2188 = vmatprep.subr.mxu0 0.0
    %2189 = vmatpush1.xpose.msra.mxu0 0.0
    %2190 = vmatprep.subr.mxu0 0.0
    %2191 = vmatpush1.xpose.msra.mxu0 0.0
    %2192 = vmatprep.subr.mxu0 0.0
    %2193 = vmatpush1.xpose.msra.mxu0 0.0
    %2194 = vmatprep.subr.mxu0 0.0
    %2195 = vmatpush1.xpose.msra.mxu0 0.0
    %2196 = vmatprep.subr.mxu0 0.0
    %2197 = vmatpush1.xpose.msra.mxu0 0.0
    %2198 = vmatprep.subr.mxu0 0.0
    %2199 = vmatpush1.xpose.msra.mxu0 0.0
    %2200 = vmatprep.subr.mxu0 0.0
    %2201 = vmatpush1.xpose.msra.mxu0 0.0
    %2202 = vmatprep.subr.mxu0 0.0
    %2203 = vmatpush1.xpose.msra.mxu0 0.0
    %2204 = vmatprep.subr.mxu0 0.0
    %2205 = vmatpush1.xpose.msra.mxu0 0.0
    %2206 = vmatprep.subr.mxu0 0.0
    %2207 = vmatpush1.xpose.msra.mxu0 0.0
    %2208 = vmatprep.subr.mxu0 0.0
    %2209 = vmatpush1.xpose.msra.mxu0 0.0
    %2210 = vmatprep.subr.mxu0 0.0
    %2211 = vmatpush1.xpose.msra.mxu0 0.0
    %2212 = vmatprep.subr.mxu0 0.0
    %2213 = vmatpush1.xpose.msra.mxu0 %v2180
    %2214 = vmatprep.subr.mxu0 0.0
    %2215 = vmatpush2.xpose.msra.mxu0 0.0
    %2216 = vmatprep.subr.mxu0 0.0
    %2217 = vmatpush2.xpose.msra.mxu0 0.0
    %2218 = vmatprep.subr.mxu0 0.0
    %2219 = vmatpush2.xpose.msra.mxu0 0.0
    %2220 = vmatprep.subr.mxu0 0.0
    %2221 = vmatpush2.xpose.msra.mxu0 0.0
    %2222 = vmatprep.subr.mxu0 0.0
    %2223 = vmatpush2.xpose.msra.mxu0 0.0
    %2224 = vmatprep.subr.mxu0 0.0
    %2225 = vmatpush2.xpose.msra.mxu0 0.0
    %2226 = vmatprep.subr.mxu0 0.0
    %2227 = vmatpush2.xpose.msra.mxu0 0.0
    %2228 = vmatprep.subr.mxu0 0.0
    %2229 = vmatpush2.xpose.msra.mxu0 0.0
    %2230 = vmatprep.subr.mxu0 0.0
    %2231 = vmatpush2.xpose.msra.mxu0 0.0
    %2232 = vmatprep.subr.mxu0 0.0
    %2233 = vmatpush2.xpose.msra.mxu0 0.0
    %2234 = vmatprep.subr.mxu0 0.0
    %2235 = vmatpush2.xpose.msra.mxu0 0.0
    %2236 = vmatprep.subr.mxu0 0.0
    %2237 = vmatpush2.xpose.msra.mxu0 0.0
    %2238 = vmatprep.subr.mxu0 0.0
    %2239 = vmatpush2.xpose.msra.mxu0 0.0
    %2240 = vmatprep.subr.mxu0 0.0
    %2241 = vmatpush2.xpose.msra.mxu0 0.0
    %2242 = vmatprep.subr.mxu0 0.0
    %2243 = vmatpush2.xpose.msra.mxu0 0.0
    %2244 = vmatprep.subr.mxu0 0.0
    %2245 = vmatpush2.xpose.msra.mxu0 0.0
    %2246 = vmatprep.mubr.f32.mxu0 0.0
    %2247 = vmatmul.mubr.f32.gmra.mxu0 %v2172
    %v2248 = vpop.f32.mrf.mxu0
    %v2249 = vadd.f32 0.0, %v2248
    %v2250 = vpop.f32.mrf.mxu0
    %2251 = vmatprep.mubr.f32.mxu0 0.0
    %2252 = vmatmul.mubr.f32.gmra.mxu0 %v2174
    %v2253 = vpop.f32.mrf.mxu0
    %v2254 = vadd.f32 0.0, %v2253
    %v2255 = vpop.f32.mrf.mxu0
    %2256 = vmatprep.mubr.f32.mxu0 0.0
    %2257 = vmatmul.mubr.f32.gmra.mxu0 %v2176
    %v2258 = vpop.f32.mrf.mxu0
    %v2259 = vadd.f32 0.0, %v2258
    %v2260 = vpop.f32.mrf.mxu0
    %2261 = vmatprep.mubr.f32.mxu0 0.0
    %2262 = vmatmul.mubr.f32.gmra.mxu0 %v2178
    %v2263 = vpop.f32.mrf.mxu0
    %v2264 = vadd.f32 0.0, %v2263
    %v2265 = vpop.f32.mrf.mxu0
    %2266 = vdwg.mxu0
    %2267 = vrot.lane.b32.xlu0 %v416, 104
    %v2268 = vpop.permute.xlu0 %2267
    %2269 = vrot.lane.b32.xlu0 %v417, 104
    %v2270 = vpop.permute.xlu0 %2269
    %2271 = vrot.lane.b32.xlu0 %v418, 104
    %v2272 = vpop.permute.xlu0 %2271
    %2273 = vrot.lane.b32.xlu0 %v419, 104
    %v2274 = vpop.permute.xlu0 %2273
    %2275 = vrot.lane.b32.xlu0 %v770, 104
    %v2276 = vpop.permute.xlu0 %2275
    %v2277 = vsel %vm655, %v2268, 0
    %v2279 = vsel %vm655, %v2270, 0
    %v2281 = vsel %vm655, %v2272, 0
    %v2283 = vsel %vm655, %v2274, 0
    %v2285 = vsel %vm655, %v2276, 0
    %2287 = vmatprep.subr.mxu0 0.0
    %2288 = vmatpush1.xpose.msra.mxu0 0.0
    %2289 = vmatprep.subr.mxu0 0.0
    %2290 = vmatpush1.xpose.msra.mxu0 0.0
    %2291 = vmatprep.subr.mxu0 0.0
    %2292 = vmatpush1.xpose.msra.mxu0 0.0
    %2293 = vmatprep.subr.mxu0 0.0
    %2294 = vmatpush1.xpose.msra.mxu0 0.0
    %2295 = vmatprep.subr.mxu0 0.0
    %2296 = vmatpush1.xpose.msra.mxu0 0.0
    %2297 = vmatprep.subr.mxu0 0.0
    %2298 = vmatpush1.xpose.msra.mxu0 0.0
    %2299 = vmatprep.subr.mxu0 0.0
    %2300 = vmatpush1.xpose.msra.mxu0 0.0
    %2301 = vmatprep.subr.mxu0 0.0
    %2302 = vmatpush1.xpose.msra.mxu0 0.0
    %2303 = vmatprep.subr.mxu0 0.0
    %2304 = vmatpush1.xpose.msra.mxu0 0.0
    %2305 = vmatprep.subr.mxu0 0.0
    %2306 = vmatpush1.xpose.msra.mxu0 0.0
    %2307 = vmatprep.subr.mxu0 0.0
    %2308 = vmatpush1.xpose.msra.mxu0 0.0
    %2309 = vmatprep.subr.mxu0 0.0
    %2310 = vmatpush1.xpose.msra.mxu0 0.0
    %2311 = vmatprep.subr.mxu0 0.0
    %2312 = vmatpush1.xpose.msra.mxu0 0.0
    %2313 = vmatprep.subr.mxu0 0.0
    %2314 = vmatpush1.xpose.msra.mxu0 0.0
    %2315 = vmatprep.subr.mxu0 0.0
    %2316 = vmatpush1.xpose.msra.mxu0 0.0
    %2317 = vmatprep.subr.mxu0 0.0
    %2318 = vmatpush1.xpose.msra.mxu0 %v2285
    %2319 = vmatprep.subr.mxu0 0.0
    %2320 = vmatpush2.xpose.msra.mxu0 0.0
    %2321 = vmatprep.subr.mxu0 0.0
    %2322 = vmatpush2.xpose.msra.mxu0 0.0
    %2323 = vmatprep.subr.mxu0 0.0
    %2324 = vmatpush2.xpose.msra.mxu0 0.0
    %2325 = vmatprep.subr.mxu0 0.0
    %2326 = vmatpush2.xpose.msra.mxu0 0.0
    %2327 = vmatprep.subr.mxu0 0.0
    %2328 = vmatpush2.xpose.msra.mxu0 0.0
    %2329 = vmatprep.subr.mxu0 0.0
    %2330 = vmatpush2.xpose.msra.mxu0 0.0
    %2331 = vmatprep.subr.mxu0 0.0
    %2332 = vmatpush2.xpose.msra.mxu0 0.0
    %2333 = vmatprep.subr.mxu0 0.0
    %2334 = vmatpush2.xpose.msra.mxu0 0.0
    %2335 = vmatprep.subr.mxu0 0.0
    %2336 = vmatpush2.xpose.msra.mxu0 0.0
    %2337 = vmatprep.subr.mxu0 0.0
    %2338 = vmatpush2.xpose.msra.mxu0 0.0
    %2339 = vmatprep.subr.mxu0 0.0
    %2340 = vmatpush2.xpose.msra.mxu0 0.0
    %2341 = vmatprep.subr.mxu0 0.0
    %2342 = vmatpush2.xpose.msra.mxu0 0.0
    %2343 = vmatprep.subr.mxu0 0.0
    %2344 = vmatpush2.xpose.msra.mxu0 0.0
    %2345 = vmatprep.subr.mxu0 0.0
    %2346 = vmatpush2.xpose.msra.mxu0 0.0
    %2347 = vmatprep.subr.mxu0 0.0
    %2348 = vmatpush2.xpose.msra.mxu0 0.0
    %2349 = vmatprep.subr.mxu0 0.0
    %2350 = vmatpush2.xpose.msra.mxu0 0.0
    %2351 = vmatprep.mubr.f32.mxu0 0.0
    %2352 = vmatmul.mubr.f32.gmra.mxu0 %v2277
    %v2353 = vpop.f32.mrf.mxu0
    %v2354 = vadd.f32 0.0, %v2353
    %v2355 = vpop.f32.mrf.mxu0
    %2356 = vmatprep.mubr.f32.mxu0 0.0
    %2357 = vmatmul.mubr.f32.gmra.mxu0 %v2279
    %v2358 = vpop.f32.mrf.mxu0
    %v2359 = vadd.f32 0.0, %v2358
    %v2360 = vpop.f32.mrf.mxu0
    %2361 = vmatprep.mubr.f32.mxu0 0.0
    %2362 = vmatmul.mubr.f32.gmra.mxu0 %v2281
    %v2363 = vpop.f32.mrf.mxu0
    %v2364 = vadd.f32 0.0, %v2363
    %v2365 = vpop.f32.mrf.mxu0
    %2366 = vmatprep.mubr.f32.mxu0 0.0
    %2367 = vmatmul.mubr.f32.gmra.mxu0 %v2283
    %v2368 = vpop.f32.mrf.mxu0
    %v2369 = vadd.f32 0.0, %v2368
    %v2370 = vpop.f32.mrf.mxu0
    %2371 = vdwg.mxu0
    %v2372 = vsel %vm870, %v2249, -inf
    %2373 = vmax.xlane.f32.xlu0 %v2372
    %v2374 = vpop.xlane.xlu0 %2373
    %v2375 = vsel %vm870, %v2254, -inf
    %2376 = vmax.xlane.f32.xlu0 %v2375
    %v2377 = vpop.xlane.xlu0 %2376
    %v2378 = vsel %vm870, %v2259, -inf
    %2379 = vmax.xlane.f32.xlu0 %v2378
    %v2380 = vpop.xlane.xlu0 %2379
    %v2381 = vsel %vm870, %v2264, -inf
    %2382 = vmax.xlane.f32.xlu0 %v2381
    %v2383 = vpop.xlane.xlu0 %2382
    %v2384 = vsel %vm870, %v2354, -inf
    %2385 = vmax.xlane.f32.xlu0 %v2384
    %v2386 = vpop.xlane.xlu0 %2385
    %v2387 = vsel %vm870, %v2359, -inf
    %2388 = vmax.xlane.f32.xlu0 %v2387
    %v2389 = vpop.xlane.xlu0 %2388
    %v2390 = vsel %vm870, %v2364, -inf
    %2391 = vmax.xlane.f32.xlu0 %v2390
    %v2392 = vpop.xlane.xlu0 %2391
    %v2393 = vsel %vm870, %v2369, -inf
    %2394 = vmax.xlane.f32.xlu0 %v2393
    %v2395 = vpop.xlane.xlu0 %2394
    %v2396 = vsub.f32 %v2249, %v2374
    %v2397 = vsub.f32 %v2254, %v2377
    %v2398 = vsub.f32 %v2259, %v2380
    %v2399 = vsub.f32 %v2264, %v2383
    %v2400 = vsub.f32 %v2354, %v2386
    %v2401 = vsub.f32 %v2359, %v2389
    %v2402 = vsub.f32 %v2364, %v2392
    %v2403 = vsub.f32 %v2369, %v2395
    %v2404 = vmul.f32 %v2396, 1.442695
    %v2405 = vpow.pop %v2404
    %v2406 = vmul.f32 %v2397, 1.442695
    %v2407 = vpow.pop %v2406
    %v2408 = vmul.f32 %v2398, 1.442695
    %v2409 = vpow.pop %v2408
    %v2410 = vmul.f32 %v2399, 1.442695
    %v2411 = vpow.pop %v2410
    %v2412 = vmul.f32 %v2400, 1.442695
    %v2413 = vpow.pop %v2412
    %v2414 = vmul.f32 %v2401, 1.442695
    %v2415 = vpow.pop %v2414
    %v2416 = vmul.f32 %v2402, 1.442695
    %v2417 = vpow.pop %v2416
    %v2418 = vmul.f32 %v2403, 1.442695
    %v2419 = vpow.pop %v2418
    %v2420 = vsel %vm870, %v2405, 0.0
    %2421 = vadd.xlane.f32.xlu0 %v2420
    %v2422 = vpop.xlane.xlu0 %2421
    %v2423 = vsel %vm870, %v2407, 0.0
    %2424 = vadd.xlane.f32.xlu0 %v2423
    %v2425 = vpop.xlane.xlu0 %2424
    %v2426 = vsel %vm870, %v2409, 0.0
    %2427 = vadd.xlane.f32.xlu0 %v2426
    %v2428 = vpop.xlane.xlu0 %2427
    %v2429 = vsel %vm870, %v2411, 0.0
    %2430 = vadd.xlane.f32.xlu0 %v2429
    %v2431 = vpop.xlane.xlu0 %2430
    %v2432 = vsel %vm870, %v2413, 0.0
    %2433 = vadd.xlane.f32.xlu0 %v2432
    %v2434 = vpop.xlane.xlu0 %2433
    %v2435 = vsel %vm870, %v2415, 0.0
    %2436 = vadd.xlane.f32.xlu0 %v2435
    %v2437 = vpop.xlane.xlu0 %2436
    %v2438 = vsel %vm870, %v2417, 0.0
    %2439 = vadd.xlane.f32.xlu0 %v2438
    %v2440 = vpop.xlane.xlu0 %2439
    %v2441 = vsel %vm870, %v2419, 0.0
    %2442 = vadd.xlane.f32.xlu0 %v2441
    %v2443 = vpop.xlane.xlu0 %2442
    %v2444 = vrcp.pop %v2422
    %v2445 = vrcp.pop %v2425
    %v2446 = vrcp.pop %v2428
    %v2447 = vrcp.pop %v2431
    %v2448 = vrcp.pop %v2434
    %v2449 = vrcp.pop %v2437
    %v2450 = vrcp.pop %v2440
    %v2451 = vrcp.pop %v2443
    %v2452 = vmul.f32 %v2405, %v2444
    %v2453 = vmul.f32 %v2407, %v2445
    %v2454 = vmul.f32 %v2409, %v2446
    %v2455 = vmul.f32 %v2411, %v2447
    %v2456 = vmul.f32 %v2413, %v2448
    %v2457 = vmul.f32 %v2415, %v2449
    %v2458 = vmul.f32 %v2417, %v2450
    %v2459 = vmul.f32 %v2419, %v2451
    %2460 = vrot.lane.b32.xlu0 %v654, 72
    %v2461 = vpop.permute.xlu0 %2460
    %v2463 = vsel %vm870, %v2452, 0
    %v2466 = vsel %vm870, %v2453, 0
    %v2469 = vsel %vm870, %v2454, 0
    %v2472 = vsel %vm870, %v2455, 0
    %v2474 = vsel %vm973, %v2461, 0
    %2476 = vmatprep.subr.mxu0 0.0
    %2477 = vmatpush1.msra.mxu0 0.0
    %2478 = vmatprep.subr.mxu0 0.0
    %2479 = vmatpush1.msra.mxu0 0.0
    %2480 = vmatprep.subr.mxu0 0.0
    %2481 = vmatpush1.msra.mxu0 0.0
    %2482 = vmatprep.subr.mxu0 0.0
    %2483 = vmatpush1.msra.mxu0 0.0
    %2484 = vmatprep.subr.mxu0 0.0
    %2485 = vmatpush1.msra.mxu0 0.0
    %2486 = vmatprep.subr.mxu0 0.0
    %2487 = vmatpush1.msra.mxu0 0.0
    %2488 = vmatprep.subr.mxu0 0.0
    %2489 = vmatpush1.msra.mxu0 0.0
    %2490 = vmatprep.subr.mxu0 0.0
    %2491 = vmatpush1.msra.mxu0 0.0
    %2492 = vmatprep.subr.mxu0 0.0
    %2493 = vmatpush1.msra.mxu0 0.0
    %2494 = vmatprep.subr.mxu0 0.0
    %2495 = vmatpush1.msra.mxu0 0.0
    %2496 = vmatprep.subr.mxu0 0.0
    %2497 = vmatpush1.msra.mxu0 0.0
    %2498 = vmatprep.subr.mxu0 0.0
    %2499 = vmatpush1.msra.mxu0 0.0
    %2500 = vmatprep.subr.mxu0 0.0
    %2501 = vmatpush1.msra.mxu0 0.0
    %2502 = vmatprep.subr.mxu0 0.0
    %2503 = vmatpush1.msra.mxu0 0.0
    %2504 = vmatprep.subr.mxu0 0.0
    %2505 = vmatpush1.msra.mxu0 0.0
    %2506 = vmatprep.subr.mxu0 0.0
    %2507 = vmatpush1.msra.mxu0 %v2474
    %2508 = vmatprep.subr.mxu0 0.0
    %2509 = vmatpush2.msra.mxu0 0.0
    %2510 = vmatprep.subr.mxu0 0.0
    %2511 = vmatpush2.msra.mxu0 0.0
    %2512 = vmatprep.subr.mxu0 0.0
    %2513 = vmatpush2.msra.mxu0 0.0
    %2514 = vmatprep.subr.mxu0 0.0
    %2515 = vmatpush2.msra.mxu0 0.0
    %2516 = vmatprep.subr.mxu0 0.0
    %2517 = vmatpush2.msra.mxu0 0.0
    %2518 = vmatprep.subr.mxu0 0.0
    %2519 = vmatpush2.msra.mxu0 0.0
    %2520 = vmatprep.subr.mxu0 0.0
    %2521 = vmatpush2.msra.mxu0 0.0
    %2522 = vmatprep.subr.mxu0 0.0
    %2523 = vmatpush2.msra.mxu0 0.0
    %2524 = vmatprep.subr.mxu0 0.0
    %2525 = vmatpush2.msra.mxu0 0.0
    %2526 = vmatprep.subr.mxu0 0.0
    %2527 = vmatpush2.msra.mxu0 0.0
    %2528 = vmatprep.subr.mxu0 0.0
    %2529 = vmatpush2.msra.mxu0 0.0
    %2530 = vmatprep.subr.mxu0 0.0
    %2531 = vmatpush2.msra.mxu0 0.0
    %2532 = vmatprep.subr.mxu0 0.0
    %2533 = vmatpush2.msra.mxu0 0.0
    %2534 = vmatprep.subr.mxu0 0.0
    %2535 = vmatpush2.msra.mxu0 0.0
    %2536 = vmatprep.subr.mxu0 0.0
    %2537 = vmatpush2.msra.mxu0 0.0
    %2538 = vmatprep.subr.mxu0 0.0
    %2539 = vmatpush2.msra.mxu0 0.0
    %2540 = vmatprep.mubr.f32.mxu0 0.0
    %2541 = vmatmul.mubr.f32.gmra.mxu0 %v2463
    %v2542 = vpop.f32.mrf.mxu0
    %v2543 = vadd.f32 0.0, %v2542
    %v2544 = vpop.f32.mrf.mxu0
    %2545 = vmatprep.mubr.f32.mxu0 0.0
    %2546 = vmatmul.mubr.f32.gmra.mxu0 %v2466
    %v2547 = vpop.f32.mrf.mxu0
    %v2548 = vadd.f32 0.0, %v2547
    %v2549 = vpop.f32.mrf.mxu0
    %2550 = vmatprep.mubr.f32.mxu0 0.0
    %2551 = vmatmul.mubr.f32.gmra.mxu0 %v2469
    %v2552 = vpop.f32.mrf.mxu0
    %v2553 = vadd.f32 0.0, %v2552
    %v2554 = vpop.f32.mrf.mxu0
    %2555 = vmatprep.mubr.f32.mxu0 0.0
    %2556 = vmatmul.mubr.f32.gmra.mxu0 %v2472
    %v2557 = vpop.f32.mrf.mxu0
    %v2558 = vadd.f32 0.0, %v2557
    %v2559 = vpop.f32.mrf.mxu0
    %2560 = vdwg.mxu0
    %2561 = vrot.lane.b32.xlu0 %v770, 72
    %v2562 = vpop.permute.xlu0 %2561
    %v2564 = vsel %vm870, %v2456, 0
    %v2567 = vsel %vm870, %v2457, 0
    %v2570 = vsel %vm870, %v2458, 0
    %v2573 = vsel %vm870, %v2459, 0
    %v2575 = vsel %vm973, %v2562, 0
    %2577 = vmatprep.subr.mxu0 0.0
    %2578 = vmatpush1.msra.mxu0 0.0
    %2579 = vmatprep.subr.mxu0 0.0
    %2580 = vmatpush1.msra.mxu0 0.0
    %2581 = vmatprep.subr.mxu0 0.0
    %2582 = vmatpush1.msra.mxu0 0.0
    %2583 = vmatprep.subr.mxu0 0.0
    %2584 = vmatpush1.msra.mxu0 0.0
    %2585 = vmatprep.subr.mxu0 0.0
    %2586 = vmatpush1.msra.mxu0 0.0
    %2587 = vmatprep.subr.mxu0 0.0
    %2588 = vmatpush1.msra.mxu0 0.0
    %2589 = vmatprep.subr.mxu0 0.0
    %2590 = vmatpush1.msra.mxu0 0.0
    %2591 = vmatprep.subr.mxu0 0.0
    %2592 = vmatpush1.msra.mxu0 0.0
    %2593 = vmatprep.subr.mxu0 0.0
    %2594 = vmatpush1.msra.mxu0 0.0
    %2595 = vmatprep.subr.mxu0 0.0
    %2596 = vmatpush1.msra.mxu0 0.0
    %2597 = vmatprep.subr.mxu0 0.0
    %2598 = vmatpush1.msra.mxu0 0.0
    %2599 = vmatprep.subr.mxu0 0.0
    %2600 = vmatpush1.msra.mxu0 0.0
    %2601 = vmatprep.subr.mxu0 0.0
    %2602 = vmatpush1.msra.mxu0 0.0
    %2603 = vmatprep.subr.mxu0 0.0
    %2604 = vmatpush1.msra.mxu0 0.0
    %2605 = vmatprep.subr.mxu0 0.0
    %2606 = vmatpush1.msra.mxu0 0.0
    %2607 = vmatprep.subr.mxu0 0.0
    %2608 = vmatpush1.msra.mxu0 %v2575
    %2609 = vmatprep.subr.mxu0 0.0
    %2610 = vmatpush2.msra.mxu0 0.0
    %2611 = vmatprep.subr.mxu0 0.0
    %2612 = vmatpush2.msra.mxu0 0.0
    %2613 = vmatprep.subr.mxu0 0.0
    %2614 = vmatpush2.msra.mxu0 0.0
    %2615 = vmatprep.subr.mxu0 0.0
    %2616 = vmatpush2.msra.mxu0 0.0
    %2617 = vmatprep.subr.mxu0 0.0
    %2618 = vmatpush2.msra.mxu0 0.0
    %2619 = vmatprep.subr.mxu0 0.0
    %2620 = vmatpush2.msra.mxu0 0.0
    %2621 = vmatprep.subr.mxu0 0.0
    %2622 = vmatpush2.msra.mxu0 0.0
    %2623 = vmatprep.subr.mxu0 0.0
    %2624 = vmatpush2.msra.mxu0 0.0
    %2625 = vmatprep.subr.mxu0 0.0
    %2626 = vmatpush2.msra.mxu0 0.0
    %2627 = vmatprep.subr.mxu0 0.0
    %2628 = vmatpush2.msra.mxu0 0.0
    %2629 = vmatprep.subr.mxu0 0.0
    %2630 = vmatpush2.msra.mxu0 0.0
    %2631 = vmatprep.subr.mxu0 0.0
    %2632 = vmatpush2.msra.mxu0 0.0
    %2633 = vmatprep.subr.mxu0 0.0
    %2634 = vmatpush2.msra.mxu0 0.0
    %2635 = vmatprep.subr.mxu0 0.0
    %2636 = vmatpush2.msra.mxu0 0.0
    %2637 = vmatprep.subr.mxu0 0.0
    %2638 = vmatpush2.msra.mxu0 0.0
    %2639 = vmatprep.subr.mxu0 0.0
    %2640 = vmatpush2.msra.mxu0 0.0
    %2641 = vmatprep.mubr.f32.mxu0 0.0
    %2642 = vmatmul.mubr.f32.gmra.mxu0 %v2564
    %v2643 = vpop.f32.mrf.mxu0
    %v2644 = vadd.f32 0.0, %v2643
    %v2645 = vpop.f32.mrf.mxu0
    %2646 = vmatprep.mubr.f32.mxu0 0.0
    %2647 = vmatmul.mubr.f32.gmra.mxu0 %v2567
    %v2648 = vpop.f32.mrf.mxu0
    %v2649 = vadd.f32 0.0, %v2648
    %v2650 = vpop.f32.mrf.mxu0
    %2651 = vmatprep.mubr.f32.mxu0 0.0
    %2652 = vmatmul.mubr.f32.gmra.mxu0 %v2570
    %v2653 = vpop.f32.mrf.mxu0
    %v2654 = vadd.f32 0.0, %v2653
    %v2655 = vpop.f32.mrf.mxu0
    %2656 = vmatprep.mubr.f32.mxu0 0.0
    %2657 = vmatmul.mubr.f32.gmra.mxu0 %v2573
    %v2658 = vpop.f32.mrf.mxu0
    %v2659 = vadd.f32 0.0, %v2658
    %v2660 = vpop.f32.mrf.mxu0
    %2661 = vdwg.mxu0
    %2670 = vrot.lane.b32.xlu0 %v1543, 8
    %v2671 = vpop.permute.xlu0 %2670
    %2672 = vrot.lane.b32.xlu0 %v1548, 8
    %v2673 = vpop.permute.xlu0 %2672
    %2674 = vrot.lane.b32.xlu0 %v1553, 8
    %v2675 = vpop.permute.xlu0 %2674
    %2676 = vrot.lane.b32.xlu0 %v1558, 8
    %v2677 = vpop.permute.xlu0 %2676
    %2678 = vrot.lane.b32.xlu0 %v1644, 8
    %v2679 = vpop.permute.xlu0 %2678
    %2680 = vrot.lane.b32.xlu0 %v1649, 8
    %v2681 = vpop.permute.xlu0 %2680
    %2682 = vrot.lane.b32.xlu0 %v1654, 8
    %v2683 = vpop.permute.xlu0 %2682
    %2684 = vrot.lane.b32.xlu0 %v1659, 8
    %v2685 = vpop.permute.xlu0 %2684
    %2702 = vrot.lane.b32.xlu0 %v2043, 16
    %v2703 = vpop.permute.xlu0 %2702
    %2704 = vrot.lane.b32.xlu0 %v2048, 16
    %v2705 = vpop.permute.xlu0 %2704
    %2706 = vrot.lane.b32.xlu0 %v2053, 16
    %v2707 = vpop.permute.xlu0 %2706
    %2708 = vrot.lane.b32.xlu0 %v2058, 16
    %v2709 = vpop.permute.xlu0 %2708
    %2710 = vrot.lane.b32.xlu0 %v2144, 16
    %v2711 = vpop.permute.xlu0 %2710
    %2712 = vrot.lane.b32.xlu0 %v2149, 16
    %v2713 = vpop.permute.xlu0 %2712
    %2714 = vrot.lane.b32.xlu0 %v2154, 16
    %v2715 = vpop.permute.xlu0 %2714
    %2716 = vrot.lane.b32.xlu0 %v2159, 16
    %v2717 = vpop.permute.xlu0 %2716
    %2734 = vrot.lane.b32.xlu0 %v2543, 24
    %v2735 = vpop.permute.xlu0 %2734
    %2736 = vrot.lane.b32.xlu0 %v2548, 24
    %v2737 = vpop.permute.xlu0 %2736
    %2738 = vrot.lane.b32.xlu0 %v2553, 24
    %v2739 = vpop.permute.xlu0 %2738
    %2740 = vrot.lane.b32.xlu0 %v2558, 24
    %v2741 = vpop.permute.xlu0 %2740
    %2742 = vrot.lane.b32.xlu0 %v2644, 24
    %v2743 = vpop.permute.xlu0 %2742
    %2744 = vrot.lane.b32.xlu0 %v2649, 24
    %v2745 = vpop.permute.xlu0 %2744
    %2746 = vrot.lane.b32.xlu0 %v2654, 24
    %v2747 = vpop.permute.xlu0 %2746
    %2748 = vrot.lane.b32.xlu0 %v2659, 24
    %v2749 = vpop.permute.xlu0 %2748
    %v2758 = vsel %vm655, %v1043, %v2671
    %v2759 = vsel %vm655, %v1048, %v2673
    %v2760 = vsel %vm655, %v1053, %v2675
    %v2761 = vsel %vm655, %v1058, %v2677
    %v2762 = vsel %vm655, %v1144, %v2679
    %v2763 = vsel %vm655, %v1149, %v2681
    %v2764 = vsel %vm655, %v1154, %v2683
    %v2765 = vsel %vm655, %v1159, %v2685
    %vm2766 = vcmask 130048
    %v2767 = vsel %vm2766, %v2758, %v2703
    %v2768 = vsel %vm2766, %v2759, %v2705
    %v2769 = vsel %vm2766, %v2760, %v2707
    %v2770 = vsel %vm2766, %v2761, %v2709
    %v2771 = vsel %vm2766, %v2762, %v2711
    %v2772 = vsel %vm2766, %v2763, %v2713
    %v2773 = vsel %vm2766, %v2764, %v2715
    %v2774 = vsel %vm2766, %v2765, %v2717
    %vm2775 = vcmask 195584
    %v2776 = vsel %vm2775, %v2767, %v2735
    %v2777 = vsel %vm2775, %v2768, %v2737
    %v2778 = vsel %vm2775, %v2769, %v2739
    %v2779 = vsel %vm2775, %v2770, %v2741
    %v2780 = vsel %vm2775, %v2771, %v2743
    %v2781 = vsel %vm2775, %v2772, %v2745
    %v2782 = vsel %vm2775, %v2773, %v2747
    %v2783 = vsel %vm2775, %v2774, %v2749
    %s2784 = scalar_lea.vmem %s2, 64
    %v2785 = vld [vmem:[%s2784] sm:$0xff]
    %v2786 = vld [vmem:[%s2784 + $0x8] sm:$0xff]
    %v2787 = vld [vmem:[%s2784 + $0x10] sm:$0xff]
    %v2788 = vld [vmem:[%s2784 + $0x18] sm:$0xff]
    %v2789 = vld [vmem:[%s3 + $0x2] sm:$0x1]
    %v2790 = vlaneseq
    %v2791 = vshrl.u32 %v2790, 7
    %v2792 = vsub.s32 0, %v2791
    %v2793 = vrot.slane %v2789, %v2792
    %v2795 = vsel %vm37, %v2776, 0
    %v2798 = vsel %vm37, %v2777, 0
    %v2801 = vsel %vm37, %v2778, 0
    %v2804 = vsel %vm37, %v2779, 0
    %v2807 = vsel %vm37, %v2780, 0
    %v2810 = vsel %vm37, %v2781, 0
    %v2813 = vsel %vm37, %v2782, 0
    %v2816 = vsel %vm37, %v2783, 0
    %2818 = vmatprep.subr.mxu0 0.0
    %2819 = vmatpush1.msra.mxu0 0.0
    %2820 = vmatprep.subr.mxu0 0.0
    %2821 = vmatpush1.msra.mxu0 0.0
    %2822 = vmatprep.subr.mxu0 0.0
    %2823 = vmatpush1.msra.mxu0 0.0
    %2824 = vmatprep.subr.mxu0 0.0
    %2825 = vmatpush1.msra.mxu0 0.0
    %2826 = vmatprep.subr.mxu0 0.0
    %2827 = vmatpush1.msra.mxu0 0.0
    %2828 = vmatprep.subr.mxu0 0.0
    %2829 = vmatpush1.msra.mxu0 0.0
    %2830 = vmatprep.subr.mxu0 0.0
    %2831 = vmatpush1.msra.mxu0 0.0
    %2832 = vmatprep.subr.mxu0 0.0
    %2833 = vmatpush1.msra.mxu0 0.0
    %2834 = vmatprep.subr.mxu0 0.0
    %2835 = vmatpush1.msra.mxu0 0.0
    %2836 = vmatprep.subr.mxu0 0.0
    %2837 = vmatpush1.msra.mxu0 0.0
    %2838 = vmatprep.subr.mxu0 0.0
    %2839 = vmatpush1.msra.mxu0 0.0
    %2840 = vmatprep.subr.mxu0 0.0
    %2841 = vmatpush1.msra.mxu0 0.0
    %2842 = vmatprep.subr.mxu0 0.0
    %2843 = vmatpush1.msra.mxu0 %v2788
    %2844 = vmatprep.subr.mxu0 0.0
    %2845 = vmatpush1.msra.mxu0 %v2787
    %2846 = vmatprep.subr.mxu0 0.0
    %2847 = vmatpush1.msra.mxu0 %v2786
    %2848 = vmatprep.subr.mxu0 0.0
    %2849 = vmatpush1.msra.mxu0 %v2785
    %2850 = vmatprep.subr.mxu0 0.0
    %2851 = vmatpush2.msra.mxu0 0.0
    %2852 = vmatprep.subr.mxu0 0.0
    %2853 = vmatpush2.msra.mxu0 0.0
    %2854 = vmatprep.subr.mxu0 0.0
    %2855 = vmatpush2.msra.mxu0 0.0
    %2856 = vmatprep.subr.mxu0 0.0
    %2857 = vmatpush2.msra.mxu0 0.0
    %2858 = vmatprep.subr.mxu0 0.0
    %2859 = vmatpush2.msra.mxu0 0.0
    %2860 = vmatprep.subr.mxu0 0.0
    %2861 = vmatpush2.msra.mxu0 0.0
    %2862 = vmatprep.subr.mxu0 0.0
    %2863 = vmatpush2.msra.mxu0 0.0
    %2864 = vmatprep.subr.mxu0 0.0
    %2865 = vmatpush2.msra.mxu0 0.0
    %2866 = vmatprep.subr.mxu0 0.0
    %2867 = vmatpush2.msra.mxu0 0.0
    %2868 = vmatprep.subr.mxu0 0.0
    %2869 = vmatpush2.msra.mxu0 0.0
    %2870 = vmatprep.subr.mxu0 0.0
    %2871 = vmatpush2.msra.mxu0 0.0
    %2872 = vmatprep.subr.mxu0 0.0
    %2873 = vmatpush2.msra.mxu0 0.0
    %2874 = vmatprep.subr.mxu0 0.0
    %2875 = vmatpush2.msra.mxu0 0.0
    %2876 = vmatprep.subr.mxu0 0.0
    %2877 = vmatpush2.msra.mxu0 0.0
    %2878 = vmatprep.subr.mxu0 0.0
    %2879 = vmatpush2.msra.mxu0 0.0
    %2880 = vmatprep.subr.mxu0 0.0
    %2881 = vmatpush2.msra.mxu0 0.0
    %2882 = vmatprep.mubr.f32.mxu0 0.0
    %2883 = vmatmul.mubr.f32.gmra.mxu0 %v2795
    %v2884 = vpop.f32.mrf.mxu0
    %v2885 = vadd.f32 %v2793, %v2884
    %v2886 = vpop.f32.mrf.mxu0
    %2887 = vmatprep.mubr.f32.mxu0 0.0
    %2888 = vmatmul.mubr.f32.gmra.mxu0 %v2798
    %v2889 = vpop.f32.mrf.mxu0
    %v2890 = vadd.f32 %v2793, %v2889
    %v2891 = vpop.f32.mrf.mxu0
    %2892 = vmatprep.mubr.f32.mxu0 0.0
    %2893 = vmatmul.mubr.f32.gmra.mxu0 %v2801
    %v2894 = vpop.f32.mrf.mxu0
    %v2895 = vadd.f32 %v2793, %v2894
    %v2896 = vpop.f32.mrf.mxu0
    %2897 = vmatprep.mubr.f32.mxu0 0.0
    %2898 = vmatmul.mubr.f32.gmra.mxu0 %v2804
    %v2899 = vpop.f32.mrf.mxu0
    %v2900 = vadd.f32 %v2793, %v2899
    %v2901 = vpop.f32.mrf.mxu0
    %2902 = vmatprep.mubr.f32.mxu0 0.0
    %2903 = vmatmul.mubr.f32.gmra.mxu0 %v2807
    %v2904 = vpop.f32.mrf.mxu0
    %v2905 = vadd.f32 %v2793, %v2904
    %v2906 = vpop.f32.mrf.mxu0
    %2907 = vmatprep.mubr.f32.mxu0 0.0
    %2908 = vmatmul.mubr.f32.gmra.mxu0 %v2810
    %v2909 = vpop.f32.mrf.mxu0
    %v2910 = vadd.f32 %v2793, %v2909
    %v2911 = vpop.f32.mrf.mxu0
    %2912 = vmatprep.mubr.f32.mxu0 0.0
    %2913 = vmatmul.mubr.f32.gmra.mxu0 %v2813
    %v2914 = vpop.f32.mrf.mxu0
    %v2915 = vadd.f32 %v2793, %v2914
    %v2916 = vpop.f32.mrf.mxu0
    %2917 = vmatprep.mubr.f32.mxu0 0.0
    %2918 = vmatmul.mubr.f32.gmra.mxu0 %v2816
    %v2919 = vpop.f32.mrf.mxu0
    %v2920 = vadd.f32 %v2793, %v2919
    %v2921 = vpop.f32.mrf.mxu0
    %2922 = vdwg.mxu0
    %2923 = vst.msk [vmem:[#allocation2] sm:$0xff] %vm37, %v2885
    %2924 = vst.msk [vmem:[#allocation2 + $0x8] sm:$0xff] %vm37, %v2890
    %2925 = vst.msk [vmem:[#allocation2 + $0x10] sm:$0xff] %vm37, %v2895
    %2926 = vst.msk [vmem:[#allocation2 + $0x18] sm:$0xff] %vm37, %v2900
    %2927 = vst.msk [vmem:[#allocation2 + $0x20] sm:$0xff] %vm37, %v2905
    %2928 = vst.msk [vmem:[#allocation2 + $0x28] sm:$0xff] %vm37, %v2910
    %2929 = vst.msk [vmem:[#allocation2 + $0x30] sm:$0xff] %vm37, %v2915
    %2930 = vst.msk [vmem:[#allocation2 + $0x38] sm:$0xff] %vm37, %v2920
    // Predicated region
    $region18: #{cross_attention_n.1} parent=1 // pred_check
      _
    $region19: #{cross_attention_n.1} parent=1 // pred_check_branch
      %2932 = sbr.rel (0) target = $region21
    $region20: #{cross_attention_n.1} parent=1 // pred_region
      %s2934 = ssub.s32 1024, 1024
      %2935 = vsyncadd [#allocation3], %s2934
      %s2936 = sshll.u32 [#allocation2], 4
      %s2937 = int_to_ptr.vmem [resolvable:$true] %s2936
      %2942 = dma.vmem_to_hbm [thread:$0]  %s2937, 1024, %s4, [#allocation3], 128, 128, 8
    $region21: #{cross_attention_n.1} parent=1 // pred_fallthru
      _
    // Predicated region
    $region22: #{cross_attention_n.1} parent=1 // pred_check
      _
    $region23: #{cross_attention_n.1} parent=1 // pred_check_branch
      %2944 = sbr.rel (0) target = $region25
    $region24: #{cross_attention_n.1} parent=1 // pred_region
      %2945 = dma.done [#allocation3], 1024
    $region25: #{cross_attention_n.1} parent=1 // pred_fallthru
      _
    %2946 = vsyncpa [#allocation3], 1

</llo_original>
